<compile_context>
chip_gen: v7x
topology: tpu7x:2x2x1
jax: 0.10.0
libtpu: 0.0.40
codegen_flags: <defaults>
</compile_context>

<pallas_src>
import jax
import jax.numpy as jnp
from jax import lax
from jax.experimental import pallas as pl
from jax.experimental.pallas import tpu as pltpu


LEAKY_SLOPE = 0.01       # PyTorch nn.LeakyReLU default negative_slope
BN_EPS = 1e-5
ENCODER_STRIDES = (2, 2, 1)   # static conv strides (kept out of the jit pytree)


# ---------------------------------------------------------------------------
# Pallas kernels
# ---------------------------------------------------------------------------
def conv_block_kernel(x_ref, w_ref, b_ref, scale_ref, shift_ref, o_ref):
    """im2col Conv1d + bias + LeakyReLU + folded (eval-mode) BatchNorm1d.

    x_ref:  (M, K) = (B*Lout, 3*Cin) f32      w_ref: (K, Cout) f32
    b_ref / scale_ref / shift_ref: (1, Cout) f32
    o_ref:  (M, Cout) f32
    """
    y = jnp.dot(x_ref[...], w_ref[...], preferred_element_type=jnp.float32)
    y = y + b_ref[...]
    y = jnp.where(y > 0, y, LEAKY_SLOPE * y)            # LeakyReLU
    o_ref[...] = (y * scale_ref[...] + shift_ref[...]).astype(o_ref.dtype)


def dense_softmax_kernel(x_ref, wt_ref, b_ref, o_ref):
    """softmax(x @ W^T + b, axis=-1); bf16 streams, f32 accumulation.

    x_ref: (tm, K) bf16    wt_ref: (N, K) bf16 (lane-dense K)    b_ref: (1, N) f32
    o_ref: (tm, N) f32
    """
    logits = lax.dot_general(
        x_ref[...], wt_ref[...],
        dimension_numbers=(((1,), (1,)), ((), ())),     # contract K on lanes
        preferred_element_type=jnp.float32) + b_ref[...]
    m = jnp.max(logits, axis=-1, keepdims=True)
    e = jnp.exp(logits - m)
    denom = jnp.sum(e, axis=-1, keepdims=True)
    o_ref[...] = (e * pl.reciprocal(denom, approx=False)).astype(o_ref.dtype)


# ---------------------------------------------------------------------------
# Pallas wrappers
# ---------------------------------------------------------------------------
def conv_block(x2d, w2d, b, scale, shift):
    M, K = x2d.shape
    Kw, cout = w2d.shape
    assert K == Kw
    vmem = pl.BlockSpec(memory_space=pltpu.MemorySpace.VMEM)   # full-array blocks
    return pl.pallas_call(
        conv_block_kernel,
        out_shape=jax.ShapeDtypeStruct((M, cout), jnp.float32),
        in_specs=[vmem] * 5,
        out_specs=vmem,
    )(x2d, w2d, b, scale, shift)


def dense_softmax(x_bf16, w_t_bf16, b_f32, *, block_b=256):
    B, K = x_bf16.shape
    N, Kw = w_t_bf16.shape
    assert K == Kw and b_f32.shape == (1, N)
    tm = B if B <= block_b else block_b          # batch tile (multiple of 8 when tiled)
    grid = (pl.cdiv(B, tm),)
    return pl.pallas_call(
        dense_softmax_kernel,
        out_shape=jax.ShapeDtypeStruct((B, N), jnp.float32),
        grid=grid,
        in_specs=[
            pl.BlockSpec((tm, K), lambda i: (i, 0)),   # batch tiles pipeline
            pl.BlockSpec((N, K), lambda i: (0, 0)),    # weight stays VMEM-resident
            pl.BlockSpec((1, N), lambda i: (0, 0)),
        ],
        out_specs=pl.BlockSpec((tm, N), lambda i: (i, 0)),
        compiler_params=pltpu.CompilerParams(
            dimension_semantics=("parallel",)),
    )(x_bf16, w_t_bf16, b_f32)


# ---------------------------------------------------------------------------
# Host-side (XLA) data rearrangement + full forward
# ---------------------------------------------------------------------------
def _unfold1d(x_blc, kernel_size, stride):
    """(B, L, C) -> ((B, Lout, k*C), Lout); taps stacked on the channel axis."""
    B, L, C = x_blc.shape
    lout = (L - kernel_size) // stride + 1
    taps = [x_blc[:, t:t + stride * (lout - 1) + 1:stride, :]
            for t in range(kernel_size)]
    return jnp.concatenate(taps, axis=-1), lout


def _fold_bn(gamma, beta, mean, var, eps=BN_EPS):
    scale = gamma / jnp.sqrt(var + eps)
    shift = beta - mean * scale
    return scale[None, :], shift[None, :]


def _prep_conv_weight(w_oik):
    """PyTorch Conv1d weight (Cout, Cin, K) -> im2col matrix (K*Cin, Cout);
    row index = t*Cin + c, matching the tap-stacking order of _unfold1d."""
    cout, cin, k = w_oik.shape
    return jnp.transpose(w_oik, (2, 1, 0)).reshape(k * cin, cout)


@jax.jit
def baseline_forward(X, params):
    """X: (B, num_channels, L) f32 -> (B, num_classes) softmax probabilities."""
    B = X.shape[0]
    act = jnp.transpose(X, (0, 2, 1))                    # (B, L, C): channels on lanes

    for (w_unf, b, scale, shift), stride in zip(params["encoders"], ENCODER_STRIDES):
        unf, lout = _unfold1d(act, kernel_size=3, stride=stride)
        kdim = unf.shape[-1]
        y2d = conv_block(unf.reshape(B * lout, kdim), w_unf, b, scale, shift)
        act = y2d.reshape(B, lout, w_unf.shape[-1])

    # PyTorch Flatten of (B, Cout, Lout): flat index = c*Lout + l
    flat = jnp.transpose(act, (0, 2, 1)).reshape(B, -1)
    # bf16 streams for the HBM-bound dense head, f32 accumulation in-kernel.
    return dense_softmax(flat.astype(jnp.bfloat16),
                         params["w_lin_t_bf16"], params["b_lin"])


# ---------------------------------------------------------------------------
# Example run + correctness check
# ---------------------------------------------------------------------------
if __name__ == "__main__":
    num_channels, num_classes = 52, 22
    batch, length = 2, 100        # length 100 -> conv stack yields 256*22 = 5632 features

    key = jax.random.PRNGKey(0)
    keys = iter(jax.random.split(key, 32))

    def uniform(k, shape, bound):
        return jax.random.uniform(k, shape, minval=-bound, maxval=bound,
                                  dtype=jnp.float32)

    conv_cfg = [(num_channels, 64), (64, 128), (128, 256)]
    raw_convs = []
    encoders = []
    for cin, cout in conv_cfg:
        bound = 1.0 / (cin * 3) ** 0.5
        w = uniform(next(keys), (cout, cin, 3), bound)
        b = uniform(next(keys), (cout,), bound)
        gamma = 1.0 + 0.1 * jax.random.normal(next(keys), (cout,), dtype=jnp.float32)
        beta = 0.1 * jax.random.normal(next(keys), (cout,), dtype=jnp.float32)
        mean = 0.1 * jax.random.normal(next(keys), (cout,), dtype=jnp.float32)
        var = jax.random.uniform(next(keys), (cout,), minval=0.5, maxval=1.5,
                                 dtype=jnp.float32)
        raw_convs.append((w, b, gamma, beta, mean, var))
        scale, shift = _fold_bn(gamma, beta, mean, var)
        encoders.append((_prep_conv_weight(w), b[None, :], scale, shift))

    in_features = 256 * 22
    lin_bound = 1.0 / in_features ** 0.5
    w_lin = uniform(next(keys), (num_classes, in_features), lin_bound)  # PyTorch (N, K)
    b_lin = uniform(next(keys), (num_classes,), lin_bound)

    params = {
        "encoders": tuple(encoders),
        "w_lin_t_bf16": w_lin.astype(jnp.bfloat16),   # already (N, K): lane-dense K
        "b_lin": b_lin[None, :],
    }

    X = jax.random.normal(next(keys), (batch, num_channels, length),
                          dtype=jnp.float32)

    y = baseline_forward(X, params)
    y = jax.block_until_ready(y)

    # ---- pure-JAX reference (eval-mode BatchNorm) ----
    def ref_forward(X, convs, w_lin, b_lin, dense_bf16):
        act = X
        for (w, b, gamma, beta, mean, var), stride in zip(convs, ENCODER_STRIDES):
            act = lax.conv_general_dilated(
                act, w, window_strides=(stride,), padding="VALID",
                dimension_numbers=("NCH", "OIH", "NCH"),
                precision=lax.Precision.HIGHEST)
            act = act + b[None, :, None]
            act = jnp.where(act > 0, act, LEAKY_SLOPE * act)
            act = (act - mean[None, :, None]) / jnp.sqrt(var + BN_EPS)[None, :, None]
            act = act * gamma[None, :, None] + beta[None, :, None]
        flat = act.reshape(act.shape[0], -1)
        wl = w_lin
        if dense_bf16:
            flat = flat.astype(jnp.bfloat16).astype(jnp.float32)
            wl = wl.astype(jnp.bfloat16).astype(jnp.float32)
        logits = jnp.dot(flat, wl.T, precision=lax.Precision.HIGHEST) + b_lin
        return jax.nn.softmax(logits, axis=1)

    ref_matched = ref_forward(X, raw_convs, w_lin, b_lin, dense_bf16=True)
    ref_f32 = ref_forward(X, raw_convs, w_lin, b_lin, dense_bf16=False)

    assert y.shape == (batch, num_classes)
    assert jnp.allclose(jnp.sum(y, axis=1), 1.0, atol=1e-5)
    assert jnp.allclose(y, ref_matched, atol=1e-3), "mismatch vs bf16-matched reference"
    assert jnp.allclose(y, ref_f32, atol=1e-2), "mismatch vs full-f32 reference"

    print("KERNEL_OK")
</pallas_src>

<mosaic_0001>
module attributes {stable_mosaic.version = 11 : i64} {
  func.func @conv_block_kernel(%arg0: memref<98x156xf32, #tpu.memory_space<vmem>>, %arg1: memref<156x64xf32, #tpu.memory_space<vmem>>, %arg2: memref<1x64xf32, #tpu.memory_space<vmem>>, %arg3: memref<1x64xf32, #tpu.memory_space<vmem>>, %arg4: memref<1x64xf32, #tpu.memory_space<vmem>>, %arg5: memref<98x64xf32, #tpu.memory_space<vmem>>) attributes {dimension_semantics = [], scalar_prefetch = 0 : i64, scratch_operands = 0 : i64, tpu.core_type = #tpu.core_type<tc>} {
    %c0 = arith.constant 0 : index
    %c0_0 = arith.constant 0 : index
    %0 = vector.load %arg0[%c0, %c0_0] : memref<98x156xf32, #tpu.memory_space<vmem>>, vector<98x156xf32>
    %c0_1 = arith.constant 0 : index
    %c0_2 = arith.constant 0 : index
    %1 = vector.load %arg1[%c0_1, %c0_2] : memref<156x64xf32, #tpu.memory_space<vmem>>, vector<156x64xf32>
    %cst = arith.constant dense<0.000000e+00> : vector<98x64xf32>
    %2 = tpu.matmul %0, %1, %cst {dimension_numbers = #tpu.dot_dimension_numbers<[1], [0], [0], [1], [0, 0, 1, 1], [], []>} : vector<98x156xf32>, vector<156x64xf32>, vector<98x64xf32> -> vector<98x64xf32>
    %c0_3 = arith.constant 0 : index
    %c0_4 = arith.constant 0 : index
    %3 = vector.load %arg2[%c0_3, %c0_4] : memref<1x64xf32, #tpu.memory_space<vmem>>, vector<1x64xf32>
    %4 = vector.broadcast %3 : vector<1x64xf32> to vector<98x64xf32>
    %5 = arith.addf %2, %4 : vector<98x64xf32>
    %cst_5 = arith.constant 0.000000e+00 : f32
    %6 = vector.broadcast %cst_5 : f32 to vector<98x64xf32>
    %7 = arith.cmpf ogt, %5, %6 : vector<98x64xf32>
    %cst_6 = arith.constant 0.00999999977 : f32
    %8 = vector.broadcast %cst_6 : f32 to vector<98x64xf32>
    %9 = arith.mulf %8, %5 : vector<98x64xf32>
    %10 = arith.select %7, %5, %9 : vector<98x64xi1>, vector<98x64xf32>
    %c0_7 = arith.constant 0 : index
    %c0_8 = arith.constant 0 : index
    %11 = vector.load %arg3[%c0_7, %c0_8] : memref<1x64xf32, #tpu.memory_space<vmem>>, vector<1x64xf32>
    %12 = vector.broadcast %11 : vector<1x64xf32> to vector<98x64xf32>
    %13 = arith.mulf %10, %12 : vector<98x64xf32>
    %c0_9 = arith.constant 0 : index
    %c0_10 = arith.constant 0 : index
    %14 = vector.load %arg4[%c0_9, %c0_10] : memref<1x64xf32, #tpu.memory_space<vmem>>, vector<1x64xf32>
    %15 = vector.broadcast %14 : vector<1x64xf32> to vector<98x64xf32>
    %16 = arith.addf %13, %15 : vector<98x64xf32>
    %c0_11 = arith.constant 0 : index
    %c0_12 = arith.constant 0 : index
    %17 = vector.load %arg5[%c0_11, %c0_12] : memref<98x64xf32, #tpu.memory_space<vmem>>, vector<98x64xf32>
    tpu.vector_store %arg5[%c0_11, %c0_12], %16 {strides = array<i32>} : memref<98x64xf32, #tpu.memory_space<vmem>>, vector<98x64xf32>,
    return
  }
}

module attributes {stable_mosaic.version = 11 : i64} {
  func.func @conv_block_kernel(%arg0: memref<48x192xf32, #tpu.memory_space<vmem>>, %arg1: memref<192x128xf32, #tpu.memory_space<vmem>>, %arg2: memref<1x128xf32, #tpu.memory_space<vmem>>, %arg3: memref<1x128xf32, #tpu.memory_space<vmem>>, %arg4: memref<1x128xf32, #tpu.memory_space<vmem>>, %arg5: memref<48x128xf32, #tpu.memory_space<vmem>>) attributes {dimension_semantics = [], scalar_prefetch = 0 : i64, scratch_operands = 0 : i64, tpu.core_type = #tpu.core_type<tc>} {
    %c0 = arith.constant 0 : index
    %c0_0 = arith.constant 0 : index
    %0 = vector.load %arg0[%c0, %c0_0] : memref<48x192xf32, #tpu.memory_space<vmem>>, vector<48x192xf32>
    %c0_1 = arith.constant 0 : index
    %c0_2 = arith.constant 0 : index
    %1 = vector.load %arg1[%c0_1, %c0_2] : memref<192x128xf32, #tpu.memory_space<vmem>>, vector<192x128xf32>
    %cst = arith.constant dense<0.000000e+00> : vector<48x128xf32>
    %2 = tpu.matmul %0, %1, %cst {dimension_numbers = #tpu.dot_dimension_numbers<[1], [0], [0], [1], [0, 0, 1, 1], [], []>} : vector<48x192xf32>, vector<192x128xf32>, vector<48x128xf32> -> vector<48x128xf32>
    %c0_3 = arith.constant 0 : index
    %c0_4 = arith.constant 0 : index
    %3 = vector.load %arg2[%c0_3, %c0_4] : memref<1x128xf32, #tpu.memory_space<vmem>>, vector<1x128xf32>
    %4 = vector.broadcast %3 : vector<1x128xf32> to vector<48x128xf32>
    %5 = arith.addf %2, %4 : vector<48x128xf32>
    %cst_5 = arith.constant 0.000000e+00 : f32
    %6 = vector.broadcast %cst_5 : f32 to vector<48x128xf32>
    %7 = arith.cmpf ogt, %5, %6 : vector<48x128xf32>
    %cst_6 = arith.constant 0.00999999977 : f32
    %8 = vector.broadcast %cst_6 : f32 to vector<48x128xf32>
    %9 = arith.mulf %8, %5 : vector<48x128xf32>
    %10 = arith.select %7, %5, %9 : vector<48x128xi1>, vector<48x128xf32>
    %c0_7 = arith.constant 0 : index
    %c0_8 = arith.constant 0 : index
    %11 = vector.load %arg3[%c0_7, %c0_8] : memref<1x128xf32, #tpu.memory_space<vmem>>, vector<1x128xf32>
    %12 = vector.broadcast %11 : vector<1x128xf32> to vector<48x128xf32>
    %13 = arith.mulf %10, %12 : vector<48x128xf32>
    %c0_9 = arith.constant 0 : index
    %c0_10 = arith.constant 0 : index
    %14 = vector.load %arg4[%c0_9, %c0_10] : memref<1x128xf32, #tpu.memory_space<vmem>>, vector<1x128xf32>
    %15 = vector.broadcast %14 : vector<1x128xf32> to vector<48x128xf32>
    %16 = arith.addf %13, %15 : vector<48x128xf32>
    %c0_11 = arith.constant 0 : index
    %c0_12 = arith.constant 0 : index
    %17 = vector.load %arg5[%c0_11, %c0_12] : memref<48x128xf32, #tpu.memory_space<vmem>>, vector<48x128xf32>
    tpu.vector_store %arg5[%c0_11, %c0_12], %16 {strides = array<i32>} : memref<48x128xf32, #tpu.memory_space<vmem>>, vector<48x128xf32>,
    return
  }
}

module attributes {stable_mosaic.version = 11 : i64} {
  func.func @conv_block_kernel(%arg0: memref<44x384xf32, #tpu.memory_space<vmem>>, %arg1: memref<384x256xf32, #tpu.memory_space<vmem>>, %arg2: memref<1x256xf32, #tpu.memory_space<vmem>>, %arg3: memref<1x256xf32, #tpu.memory_space<vmem>>, %arg4: memref<1x256xf32, #tpu.memory_space<vmem>>, %arg5: memref<44x256xf32, #tpu.memory_space<vmem>>) attributes {dimension_semantics = [], scalar_prefetch = 0 : i64, scratch_operands = 0 : i64, tpu.core_type = #tpu.core_type<tc>} {
    %c0 = arith.constant 0 : index
    %c0_0 = arith.constant 0 : index
    %0 = vector.load %arg0[%c0, %c0_0] : memref<44x384xf32, #tpu.memory_space<vmem>>, vector<44x384xf32>
    %c0_1 = arith.constant 0 : index
    %c0_2 = arith.constant 0 : index
    %1 = vector.load %arg1[%c0_1, %c0_2] : memref<384x256xf32, #tpu.memory_space<vmem>>, vector<384x256xf32>
    %cst = arith.constant dense<0.000000e+00> : vector<44x256xf32>
    %2 = tpu.matmul %0, %1, %cst {dimension_numbers = #tpu.dot_dimension_numbers<[1], [0], [0], [1], [0, 0, 1, 1], [], []>} : vector<44x384xf32>, vector<384x256xf32>, vector<44x256xf32> -> vector<44x256xf32>
    %c0_3 = arith.constant 0 : index
    %c0_4 = arith.constant 0 : index
    %3 = vector.load %arg2[%c0_3, %c0_4] : memref<1x256xf32, #tpu.memory_space<vmem>>, vector<1x256xf32>
    %4 = vector.broadcast %3 : vector<1x256xf32> to vector<44x256xf32>
    %5 = arith.addf %2, %4 : vector<44x256xf32>
    %cst_5 = arith.constant 0.000000e+00 : f32
    %6 = vector.broadcast %cst_5 : f32 to vector<44x256xf32>
    %7 = arith.cmpf ogt, %5, %6 : vector<44x256xf32>
    %cst_6 = arith.constant 0.00999999977 : f32
    %8 = vector.broadcast %cst_6 : f32 to vector<44x256xf32>
    %9 = arith.mulf %8, %5 : vector<44x256xf32>
    %10 = arith.select %7, %5, %9 : vector<44x256xi1>, vector<44x256xf32>
    %c0_7 = arith.constant 0 : index
    %c0_8 = arith.constant 0 : index
    %11 = vector.load %arg3[%c0_7, %c0_8] : memref<1x256xf32, #tpu.memory_space<vmem>>, vector<1x256xf32>
    %12 = vector.broadcast %11 : vector<1x256xf32> to vector<44x256xf32>
    %13 = arith.mulf %10, %12 : vector<44x256xf32>
    %c0_9 = arith.constant 0 : index
    %c0_10 = arith.constant 0 : index
    %14 = vector.load %arg4[%c0_9, %c0_10] : memref<1x256xf32, #tpu.memory_space<vmem>>, vector<1x256xf32>
    %15 = vector.broadcast %14 : vector<1x256xf32> to vector<44x256xf32>
    %16 = arith.addf %13, %15 : vector<44x256xf32>
    %c0_11 = arith.constant 0 : index
    %c0_12 = arith.constant 0 : index
    %17 = vector.load %arg5[%c0_11, %c0_12] : memref<44x256xf32, #tpu.memory_space<vmem>>, vector<44x256xf32>
    tpu.vector_store %arg5[%c0_11, %c0_12], %16 {strides = array<i32>} : memref<44x256xf32, #tpu.memory_space<vmem>>, vector<44x256xf32>,
    return
  }
}

module attributes {stable_mosaic.version = 11 : i64} {
  func.func @dense_softmax_kernel(%arg0: i32, %arg1: memref<2x5632xbf16, #tpu.memory_space<vmem>>, %arg2: memref<22x5632xbf16, #tpu.memory_space<vmem>>, %arg3: memref<1x22xf32, #tpu.memory_space<vmem>>, %arg4: memref<2x22xf32, #tpu.memory_space<vmem>>) attributes {dimension_semantics = [#tpu.dimension_semantics<parallel>], iteration_bounds = array<i64: 1>, scalar_prefetch = 0 : i64, scratch_operands = 0 : i64, tpu.core_type = #tpu.core_type<tc>, window_params = [{transform_indices = @transform_0, window_bounds = array<i64: 2, 5632>}, {pipeline_mode = #tpu.pipeline_mode<synchronous>, transform_indices = @transform_1, window_bounds = array<i64: 22, 5632>}, {pipeline_mode = #tpu.pipeline_mode<synchronous>, transform_indices = @transform_2, window_bounds = array<i64: 1, 22>}, {transform_indices = @transform_3, window_bounds = array<i64: 2, 22>}]} {
    %c0 = arith.constant 0 : index
    %c0_0 = arith.constant 0 : index
    %0 = vector.load %arg1[%c0, %c0_0] : memref<2x5632xbf16, #tpu.memory_space<vmem>>, vector<2x5632xbf16>
    %c0_1 = arith.constant 0 : index
    %c0_2 = arith.constant 0 : index
    %1 = vector.load %arg2[%c0_1, %c0_2] : memref<22x5632xbf16, #tpu.memory_space<vmem>>, vector<22x5632xbf16>
    %cst = arith.constant dense<0.000000e+00> : vector<2x22xf32>
    %2 = tpu.matmul %0, %1, %cst {dimension_numbers = #tpu.dot_dimension_numbers<[1], [1], [0], [0], [0, 0, 1, 0], [], []>} : vector<2x5632xbf16>, vector<22x5632xbf16>, vector<2x22xf32> -> vector<2x22xf32>
    %c0_3 = arith.constant 0 : index
    %c0_4 = arith.constant 0 : index
    %3 = vector.load %arg3[%c0_3, %c0_4] : memref<1x22xf32, #tpu.memory_space<vmem>>, vector<1x22xf32>
    %4 = vector.broadcast %3 : vector<1x22xf32> to vector<2x22xf32>
    %5 = arith.addf %2, %4 : vector<2x22xf32>
    %cst_5 = arith.constant dense<0xFF800000> : vector<2xf32>
    %6 = vector.multi_reduction <maximumf>, %5, %cst_5 [1] : vector<2x22xf32> to vector<2xf32>
    %7 = vector.shape_cast %6 : vector<2xf32> to vector<2x1xf32>
    %8 = vector.broadcast %7 : vector<2x1xf32> to vector<2x22xf32>
    %9 = arith.subf %5, %8 : vector<2x22xf32>
    %10 = math.exp %9 : vector<2x22xf32>
    %cst_6 = arith.constant dense<0.000000e+00> : vector<2xf32>
    %11 = vector.multi_reduction <add>, %10, %cst_6 [1] : vector<2x22xf32> to vector<2xf32>
    %12 = vector.shape_cast %11 : vector<2xf32> to vector<2x1xf32>
    %13 = tpu.reciprocal %12 : vector<2x1xf32> -> vector<2x1xf32>
    %14 = vector.broadcast %13 : vector<2x1xf32> to vector<2x22xf32>
    %15 = arith.mulf %10, %14 : vector<2x22xf32>
    %c0_7 = arith.constant 0 : index
    %c0_8 = arith.constant 0 : index
    %16 = vector.load %arg4[%c0_7, %c0_8] : memref<2x22xf32, #tpu.memory_space<vmem>>, vector<2x22xf32>
    tpu.vector_store %arg4[%c0_7, %c0_8], %15 {strides = array<i32>} : memref<2x22xf32, #tpu.memory_space<vmem>>, vector<2x22xf32>,
    return
  }
  func.func @transform_0(%arg0: i32) -> (i32, i32) {
    %c0_i32 = arith.constant 0 : i32
    %c0_i32_0 = arith.constant 0 : i32
    return %arg0, %c0_i32 : i32, i32
  }
  func.func @transform_1(%arg0: i32) -> (i32, i32) {
    %c0_i32 = arith.constant 0 : i32
    %c0_i32_0 = arith.constant 0 : i32
    %c0_i32_1 = arith.constant 0 : i32
    return %c0_i32, %c0_i32_0 : i32, i32
  }
  func.func @transform_2(%arg0: i32) -> (i32, i32) {
    %c0_i32 = arith.constant 0 : i32
    %c0_i32_0 = arith.constant 0 : i32
    %c0_i32_1 = arith.constant 0 : i32
    return %c0_i32, %c0_i32_0 : i32, i32
  }
  func.func @transform_3(%arg0: i32) -> (i32, i32) {
    %c0_i32 = arith.constant 0 : i32
    %c0_i32_0 = arith.constant 0 : i32
    return %arg0, %c0_i32 : i32, i32
  }
}

</mosaic_0001>

<llo_original>
// kernel: baseline_forward.4
$region0: #{baseline_forward.4}
  #allocation0 [shape = 'u32[]', space=smem, size = 0x4, offset = 0x4, fixed_abs, tag = 'smem constant byte address 0x4 - core index']
  #allocation1 [shape = 'u32[144,128]{1,0:T(1,128)}', space=vmem, size = 0x12000, scoped, tag = 'internal scratch']
  %s0 = inlined_call_operand.vmem [shape: f32[98,156], index: 0, kind: input, shape index: {}]
  %s1 = inlined_call_operand.vmem [shape: f32[156,64], index: 1, kind: input, shape index: {}]
  %s2 = inlined_call_operand.vmem [shape: f32[1,64], index: 2, kind: input, shape index: {}]
  %s3 = inlined_call_operand.vmem [shape: f32[1,64], index: 3, kind: input, shape index: {}]
  %s4 = inlined_call_operand.vmem [shape: f32[1,64], index: 4, kind: input, shape index: {}]
  %s5 = inlined_call_operand.vmem [shape: f32[98,64], index: 5, kind: output, shape index: {}]
  %s6 = sld [smem:[#allocation0]]
  $region30: #{baseline_forward.4} parent=0
    _
  %s8 = ssub.s32 1, %s6
  %s9 = scalar_select 0, %s8, %s6
  // Predicated region
  $region2: #{baseline_forward.4} parent=0 // pred_check
    _
  $region3: #{baseline_forward.4} parent=0 // pred_check_branch
    %11 = sbr.rel (0) target = $region5
  $region4: #{baseline_forward.4} parent=0 // pred_region
    _
  $region5: #{baseline_forward.4} parent=0 // pred_fallthru
    _
  // Predicated region
  $region6: #{baseline_forward.4} parent=0 // pred_check
    _
  $region7: #{baseline_forward.4} parent=0 // pred_check_branch
    %13 = sbr.rel (0) target = $region9
  $region8: #{baseline_forward.4} parent=0 // pred_region
    _
  $region9: #{baseline_forward.4} parent=0 // pred_fallthru
    _
  // Predicated region
  $region10: #{baseline_forward.4} parent=0 // pred_check
    _
  $region11: #{baseline_forward.4} parent=0 // pred_check_branch
    %15 = sbr.rel (0) target = $region13
  $region12: #{baseline_forward.4} parent=0 // pred_region
    _
  $region13: #{baseline_forward.4} parent=0 // pred_fallthru
    _
  // Predicated region
  $region14: #{baseline_forward.4} parent=0 // pred_check
    _
  $region15: #{baseline_forward.4} parent=0 // pred_check_branch
    %17 = sbr.rel (0) target = $region17
  $region16: #{baseline_forward.4} parent=0 // pred_region
    _
  $region17: #{baseline_forward.4} parent=0 // pred_fallthru
    _
  // Predicated region
  $region18: #{baseline_forward.4} parent=0 // pred_check
    _
  $region19: #{baseline_forward.4} parent=0 // pred_check_branch
    %19 = sbr.rel (0) target = $region21
  $region20: #{baseline_forward.4} parent=0 // pred_region
    _
  $region21: #{baseline_forward.4} parent=0 // pred_fallthru
    _
  %v20 = vld [vmem:[%s0] sm:$0xff]
  %v21 = vld [vmem:[%s0 + $0x8] sm:$0xff]
  %v22 = vld [vmem:[%s0 + $0x10] sm:$0xff]
  %v23 = vld [vmem:[%s0 + $0x18] sm:$0xff]
  %v24 = vld [vmem:[%s0 + $0x20] sm:$0xff]
  %v25 = vld [vmem:[%s0 + $0x28] sm:$0xff]
  %v26 = vld [vmem:[%s0 + $0x30] sm:$0xff]
  %v27 = vld [vmem:[%s0 + $0x38] sm:$0xff]
  %v28 = vld [vmem:[%s0 + $0x40] sm:$0xff]
  %v29 = vld [vmem:[%s0 + $0x48] sm:$0xff]
  %v30 = vld [vmem:[%s0 + $0x50] sm:$0xff]
  %v31 = vld [vmem:[%s0 + $0x58] sm:$0xff]
  %v32 = vld [vmem:[%s0 + $0x60] sm:$0xff]
  %v33 = vld [vmem:[%s0 + $0x68] sm:$0xff]
  %v34 = vld [vmem:[%s0 + $0x70] sm:$0xff]
  %v35 = vld [vmem:[%s0 + $0x78] sm:$0xff]
  %v36 = vld [vmem:[%s0 + $0x80] sm:$0xff]
  %v37 = vld [vmem:[%s0 + $0x88] sm:$0xff]
  %v38 = vld [vmem:[%s0 + $0x90] sm:$0xff]
  %v39 = vld [vmem:[%s0 + $0x98] sm:$0xff]
  %v40 = vld [vmem:[%s0 + $0xa0] sm:$0xff]
  %v41 = vld [vmem:[%s0 + $0xa8] sm:$0xff]
  %v42 = vld [vmem:[%s0 + $0xb0] sm:$0xff]
  %v43 = vld [vmem:[%s0 + $0xb8] sm:$0xff]
  %v44 = vld [vmem:[%s0 + $0xc0] sm:$0x3]
  %v45 = vld [vmem:[%s0 + $0xc8] sm:$0x3]
  %v46 = vld [vmem:[%s1] sm:$0xff]
  %v47 = vld [vmem:[%s1 + $0x8] sm:$0xff]
  %v48 = vld [vmem:[%s1 + $0x10] sm:$0xff]
  %v49 = vld [vmem:[%s1 + $0x18] sm:$0xff]
  %v50 = vld [vmem:[%s1 + $0x20] sm:$0xff]
  %v51 = vld [vmem:[%s1 + $0x28] sm:$0xff]
  %v52 = vld [vmem:[%s1 + $0x30] sm:$0xff]
  %v53 = vld [vmem:[%s1 + $0x38] sm:$0xff]
  %v54 = vld [vmem:[%s1 + $0x40] sm:$0xff]
  %v55 = vld [vmem:[%s1 + $0x48] sm:$0xff]
  %v56 = vld [vmem:[%s1 + $0x50] sm:$0xff]
  %v57 = vld [vmem:[%s1 + $0x58] sm:$0xff]
  %v58 = vld [vmem:[%s1 + $0x60] sm:$0xff]
  %v59 = vld [vmem:[%s1 + $0x68] sm:$0xff]
  %v60 = vld [vmem:[%s1 + $0x70] sm:$0xff]
  %v61 = vld [vmem:[%s1 + $0x78] sm:$0xff]
  %v62 = vld [vmem:[%s1 + $0x80] sm:$0xff]
  %v63 = vld [vmem:[%s1 + $0x88] sm:$0xff]
  %v64 = vld [vmem:[%s1 + $0x90] sm:$0xff]
  %v65 = vld [vmem:[%s1 + $0x98] sm:$0xf]
  %v66 = vld [vmem:[%s2] sm:$0x1]
  %v68 = vlaneseq
  %v69 = vshrl.u32 %v68, 7
  %v70 = vsub.s32 0, %v69
  %v71 = vrot.slane %v66, %v70
  %vm73 = vcmask 228352
  %v75 = vsel %vm73, %v21, 0
  %v78 = vsel %vm73, %v23, 0
  %v81 = vsel %vm73, %v25, 0
  %v84 = vsel %vm73, %v27, 0
  %v87 = vsel %vm73, %v29, 0
  %v90 = vsel %vm73, %v31, 0
  %v93 = vsel %vm73, %v33, 0
  %v96 = vsel %vm73, %v35, 0
  %v99 = vsel %vm73, %v37, 0
  %v102 = vsel %vm73, %v39, 0
  %v105 = vsel %vm73, %v41, 0
  %v108 = vsel %vm73, %v43, 0
  %v111 = vsel %vm73, %v45, 0
  %vm113 = vcmask 1043456
  %v115 = vsel %vm113, %v65, 0
  %117 = vmatprep.subr.mxu0 0.0
  %118 = vmatpush1.msra.mxu0 %v46
  %119 = vmatprep.subr.mxu0 0.0
  %120 = vmatpush1.msra.mxu0 %v47
  %121 = vmatprep.subr.mxu0 0.0
  %122 = vmatpush1.msra.mxu0 %v48
  %123 = vmatprep.subr.mxu0 0.0
  %124 = vmatpush1.msra.mxu0 %v49
  %125 = vmatprep.subr.mxu0 0.0
  %126 = vmatpush1.msra.mxu0 %v50
  %127 = vmatprep.subr.mxu0 0.0
  %128 = vmatpush1.msra.mxu0 %v51
  %129 = vmatprep.subr.mxu0 0.0
  %130 = vmatpush1.msra.mxu0 %v52
  %131 = vmatprep.subr.mxu0 0.0
  %132 = vmatpush1.msra.mxu0 %v53
  %133 = vmatprep.subr.mxu0 0.0
  %134 = vmatpush1.msra.mxu0 %v54
  %135 = vmatprep.subr.mxu0 0.0
  %136 = vmatpush1.msra.mxu0 %v55
  %137 = vmatprep.subr.mxu0 0.0
  %138 = vmatpush1.msra.mxu0 %v56
  %139 = vmatprep.subr.mxu0 0.0
  %140 = vmatpush1.msra.mxu0 %v57
  %141 = vmatprep.subr.mxu0 0.0
  %142 = vmatpush1.msra.mxu0 %v58
  %143 = vmatprep.subr.mxu0 0.0
  %144 = vmatpush1.msra.mxu0 %v59
  %145 = vmatprep.subr.mxu0 0.0
  %146 = vmatpush1.msra.mxu0 %v60
  %147 = vmatprep.subr.mxu0 0.0
  %148 = vmatpush1.msra.mxu0 %v61
  %149 = vmatprep.subr.mxu0 0.0
  %150 = vmatpush1.msra.mxu0 %v62
  %151 = vmatprep.subr.mxu0 0.0
  %152 = vmatpush1.msra.mxu0 %v63
  %153 = vmatprep.subr.mxu0 0.0
  %154 = vmatpush1.msra.mxu0 %v64
  %155 = vmatprep.subr.mxu0 0.0
  %156 = vmatpush1.msra.mxu0 %v115
  %157 = vmatprep.subr.mxu0 0.0
  %158 = vmatpush1.msra.mxu0 0.0
  %159 = vmatprep.subr.mxu0 0.0
  %160 = vmatpush1.msra.mxu0 0.0
  %161 = vmatprep.subr.mxu0 0.0
  %162 = vmatpush1.msra.mxu0 0.0
  %163 = vmatprep.subr.mxu0 0.0
  %164 = vmatpush1.msra.mxu0 0.0
  %165 = vmatprep.subr.mxu0 0.0
  %166 = vmatpush1.msra.mxu0 0.0
  %167 = vmatprep.subr.mxu0 0.0
  %168 = vmatpush1.msra.mxu0 0.0
  %169 = vmatprep.subr.mxu0 0.0
  %170 = vmatpush1.msra.mxu0 0.0
  %171 = vmatprep.subr.mxu0 0.0
  %172 = vmatpush1.msra.mxu0 0.0
  %173 = vmatprep.subr.mxu0 0.0
  %174 = vmatpush1.msra.mxu0 0.0
  %175 = vmatprep.subr.mxu0 0.0
  %176 = vmatpush1.msra.mxu0 0.0
  %177 = vmatprep.subr.mxu0 0.0
  %178 = vmatpush1.msra.mxu0 0.0
  %179 = vmatprep.subr.mxu0 0.0
  %180 = vmatpush1.msra.mxu0 0.0
  %181 = vmatprep.mubr.f32.mxu0 %v75
  %182 = vmatmul.mubr.f32.gmra.mrb[0].mxu0 %v20
  %v183 = vpop.f32.mrb[0].mxu0
  %v184 = vadd.f32 %v71, %v183
  %v185 = vpop.f32.mrb[0].mxu0
  %186 = vmatprep.mubr.f32.mxu0 %v78
  %187 = vmatmul.mubr.f32.gmra.mrb[0].mxu0 %v22
  %v188 = vpop.f32.mrb[0].mxu0
  %v189 = vadd.f32 %v71, %v188
  %v190 = vpop.f32.mrb[0].mxu0
  %191 = vmatprep.mubr.f32.mxu0 %v81
  %192 = vmatmul.mubr.f32.gmra.mrb[0].mxu0 %v24
  %v193 = vpop.f32.mrb[0].mxu0
  %v194 = vadd.f32 %v71, %v193
  %v195 = vpop.f32.mrb[0].mxu0
  %196 = vmatprep.mubr.f32.mxu0 %v84
  %197 = vmatmul.mubr.f32.gmra.mrb[0].mxu0 %v26
  %v198 = vpop.f32.mrb[0].mxu0
  %v199 = vadd.f32 %v71, %v198
  %v200 = vpop.f32.mrb[0].mxu0
  %201 = vmatprep.mubr.f32.mxu0 %v87
  %202 = vmatmul.mubr.f32.gmra.mrb[0].mxu0 %v28
  %v203 = vpop.f32.mrb[0].mxu0
  %v204 = vadd.f32 %v71, %v203
  %v205 = vpop.f32.mrb[0].mxu0
  %206 = vmatprep.mubr.f32.mxu0 %v90
  %207 = vmatmul.mubr.f32.gmra.mrb[0].mxu0 %v30
  %v208 = vpop.f32.mrb[0].mxu0
  %v209 = vadd.f32 %v71, %v208
  %v210 = vpop.f32.mrb[0].mxu0
  %211 = vmatprep.mubr.f32.mxu0 %v93
  %212 = vmatmul.mubr.f32.gmra.mrb[0].mxu0 %v32
  %v213 = vpop.f32.mrb[0].mxu0
  %v214 = vadd.f32 %v71, %v213
  %v215 = vpop.f32.mrb[0].mxu0
  %216 = vmatprep.mubr.f32.mxu0 %v96
  %217 = vmatmul.mubr.f32.gmra.mrb[0].mxu0 %v34
  %v218 = vpop.f32.mrb[0].mxu0
  %v219 = vadd.f32 %v71, %v218
  %v220 = vpop.f32.mrb[0].mxu0
  %221 = vmatprep.mubr.f32.mxu0 %v99
  %222 = vmatmul.mubr.f32.gmra.mrb[0].mxu0 %v36
  %v223 = vpop.f32.mrb[0].mxu0
  %v224 = vadd.f32 %v71, %v223
  %v225 = vpop.f32.mrb[0].mxu0
  %226 = vmatprep.mubr.f32.mxu0 %v102
  %227 = vmatmul.mubr.f32.gmra.mrb[0].mxu0 %v38
  %v228 = vpop.f32.mrb[0].mxu0
  %v229 = vadd.f32 %v71, %v228
  %v230 = vpop.f32.mrb[0].mxu0
  %231 = vmatprep.mubr.f32.mxu0 %v105
  %232 = vmatmul.mubr.f32.gmra.mrb[0].mxu0 %v40
  %v233 = vpop.f32.mrb[0].mxu0
  %v234 = vadd.f32 %v71, %v233
  %v235 = vpop.f32.mrb[0].mxu0
  %236 = vmatprep.mubr.f32.mxu0 %v108
  %237 = vmatmul.mubr.f32.gmra.mrb[0].mxu0 %v42
  %v238 = vpop.f32.mrb[0].mxu0
  %v239 = vadd.f32 %v71, %v238
  %v240 = vpop.f32.mrb[0].mxu0
  %241 = vmatprep.mubr.f32.mxu0 %v111
  %242 = vmatmul.mubr.f32.gmra.mrb[0].mxu0 %v44
  %v243 = vpop.f32.mrb[0].mxu0
  %v244 = vadd.f32 %v71, %v243
  %v245 = vpop.f32.mrb[0].mxu0
  %246 = vdwg.mxu0
  %vm247 = vcmp.gt.f32.partialorder %v184, 0.0
  %vm248 = vcmp.gt.f32.partialorder %v189, 0.0
  %vm249 = vcmp.gt.f32.partialorder %v194, 0.0
  %vm250 = vcmp.gt.f32.partialorder %v199, 0.0
  %vm251 = vcmp.gt.f32.partialorder %v204, 0.0
  %vm252 = vcmp.gt.f32.partialorder %v209, 0.0
  %vm253 = vcmp.gt.f32.partialorder %v214, 0.0
  %vm254 = vcmp.gt.f32.partialorder %v219, 0.0
  %vm255 = vcmp.gt.f32.partialorder %v224, 0.0
  %vm256 = vcmp.gt.f32.partialorder %v229, 0.0
  %vm257 = vcmp.gt.f32.partialorder %v234, 0.0
  %vm258 = vcmp.gt.f32.partialorder %v239, 0.0
  %vm259 = vcmp.gt.f32.partialorder %v244, 0.0
  %v260 = vmul.f32 %v184, 0.01
  %v261 = vmul.f32 %v189, 0.01
  %v262 = vmul.f32 %v194, 0.01
  %v263 = vmul.f32 %v199, 0.01
  %v264 = vmul.f32 %v204, 0.01
  %v265 = vmul.f32 %v209, 0.01
  %v266 = vmul.f32 %v214, 0.01
  %v267 = vmul.f32 %v219, 0.01
  %v268 = vmul.f32 %v224, 0.01
  %v269 = vmul.f32 %v229, 0.01
  %v270 = vmul.f32 %v234, 0.01
  %v271 = vmul.f32 %v239, 0.01
  %v272 = vmul.f32 %v244, 0.01
  %v273 = vsel %vm247, %v184, %v260
  %v274 = vsel %vm248, %v189, %v261
  %v275 = vsel %vm249, %v194, %v262
  %v276 = vsel %vm250, %v199, %v263
  %v277 = vsel %vm251, %v204, %v264
  %v278 = vsel %vm252, %v209, %v265
  %v279 = vsel %vm253, %v214, %v266
  %v280 = vsel %vm254, %v219, %v267
  %v281 = vsel %vm255, %v224, %v268
  %v282 = vsel %vm256, %v229, %v269
  %v283 = vsel %vm257, %v234, %v270
  %v284 = vsel %vm258, %v239, %v271
  %v285 = vsel %vm259, %v244, %v272
  %v286 = vld [vmem:[%s3] sm:$0x1]
  %v288 = vlaneseq
  %v289 = vshrl.u32 %v288, 7
  %v290 = vsub.s32 0, %v289
  %v291 = vrot.slane %v286, %v290
  %v293 = vmul.f32 %v273, %v291
  %v294 = vmul.f32 %v274, %v291
  %v295 = vmul.f32 %v275, %v291
  %v296 = vmul.f32 %v276, %v291
  %v297 = vmul.f32 %v277, %v291
  %v298 = vmul.f32 %v278, %v291
  %v299 = vmul.f32 %v279, %v291
  %v300 = vmul.f32 %v280, %v291
  %v301 = vmul.f32 %v281, %v291
  %v302 = vmul.f32 %v282, %v291
  %v303 = vmul.f32 %v283, %v291
  %v304 = vmul.f32 %v284, %v291
  %v305 = vmul.f32 %v285, %v291
  %v306 = vld [vmem:[%s4] sm:$0x1]
  %v308 = vlaneseq
  %v309 = vshrl.u32 %v308, 7
  %v310 = vsub.s32 0, %v309
  %v311 = vrot.slane %v306, %v310
  %v313 = vadd.f32 %v293, %v311
  %v314 = vadd.f32 %v294, %v311
  %v315 = vadd.f32 %v295, %v311
  %v316 = vadd.f32 %v296, %v311
  %v317 = vadd.f32 %v297, %v311
  %v318 = vadd.f32 %v298, %v311
  %v319 = vadd.f32 %v299, %v311
  %v320 = vadd.f32 %v300, %v311
  %v321 = vadd.f32 %v301, %v311
  %v322 = vadd.f32 %v302, %v311
  %v323 = vadd.f32 %v303, %v311
  %v324 = vadd.f32 %v304, %v311
  %v325 = vadd.f32 %v305, %v311
  %vm326 = vcmask 523264
  %327 = vst.msk [vmem:[%s5] sm:$0xff] %vm326, %v313
  %328 = vst.msk [vmem:[%s5 + $0x8] sm:$0xff] %vm326, %v314
  %329 = vst.msk [vmem:[%s5 + $0x10] sm:$0xff] %vm326, %v315
  %330 = vst.msk [vmem:[%s5 + $0x18] sm:$0xff] %vm326, %v316
  %331 = vst.msk [vmem:[%s5 + $0x20] sm:$0xff] %vm326, %v317
  %332 = vst.msk [vmem:[%s5 + $0x28] sm:$0xff] %vm326, %v318
  %333 = vst.msk [vmem:[%s5 + $0x30] sm:$0xff] %vm326, %v319
  %334 = vst.msk [vmem:[%s5 + $0x38] sm:$0xff] %vm326, %v320
  %335 = vst.msk [vmem:[%s5 + $0x40] sm:$0xff] %vm326, %v321
  %336 = vst.msk [vmem:[%s5 + $0x48] sm:$0xff] %vm326, %v322
  %337 = vst.msk [vmem:[%s5 + $0x50] sm:$0xff] %vm326, %v323
  %338 = vst.msk [vmem:[%s5 + $0x58] sm:$0xff] %vm326, %v324
  %vm339 = vcmask 517120
  %340 = vst.msk [vmem:[%s5 + $0x60] sm:$0x3] %vm339, %v325
  // Predicated region
  $region22: #{baseline_forward.4} parent=0 // pred_check
    _
  $region23: #{baseline_forward.4} parent=0 // pred_check_branch
    %342 = sbr.rel (0) target = $region25
  $region24: #{baseline_forward.4} parent=0 // pred_region
    _
  $region25: #{baseline_forward.4} parent=0 // pred_fallthru
    _
  // Predicated region
  $region26: #{baseline_forward.4} parent=0 // pred_check
    _
  $region27: #{baseline_forward.4} parent=0 // pred_check_branch
    %344 = sbr.rel (0) target = $region29
  $region28: #{baseline_forward.4} parent=0 // pred_region
    _
  $region29: #{baseline_forward.4} parent=0 // pred_fallthru
    _

// kernel: baseline_forward.5
$region0: #{baseline_forward.5}
  #allocation0 [shape = 'u32[]', space=smem, size = 0x4, offset = 0x4, fixed_abs, tag = 'smem constant byte address 0x4 - core index']
  #allocation1 [shape = 'u32[144,128]{1,0:T(1,128)}', space=vmem, size = 0x12000, scoped, tag = 'internal scratch']
  %s0 = inlined_call_operand.vmem [shape: f32[48,192], index: 0, kind: input, shape index: {}]
  %s1 = inlined_call_operand.vmem [shape: f32[192,128], index: 1, kind: input, shape index: {}]
  %s2 = inlined_call_operand.vmem [shape: f32[1,128], index: 2, kind: input, shape index: {}]
  %s3 = inlined_call_operand.vmem [shape: f32[1,128], index: 3, kind: input, shape index: {}]
  %s4 = inlined_call_operand.vmem [shape: f32[1,128], index: 4, kind: input, shape index: {}]
  %s5 = inlined_call_operand.vmem [shape: f32[48,128], index: 5, kind: output, shape index: {}]
  %s6 = sld [smem:[#allocation0]]
  $region30: #{baseline_forward.5} parent=0
    _
  %s8 = ssub.s32 1, %s6
  %s9 = scalar_select 0, %s8, %s6
  // Predicated region
  $region2: #{baseline_forward.5} parent=0 // pred_check
    _
  $region3: #{baseline_forward.5} parent=0 // pred_check_branch
    %11 = sbr.rel (0) target = $region5
  $region4: #{baseline_forward.5} parent=0 // pred_region
    _
  $region5: #{baseline_forward.5} parent=0 // pred_fallthru
    _
  // Predicated region
  $region6: #{baseline_forward.5} parent=0 // pred_check
    _
  $region7: #{baseline_forward.5} parent=0 // pred_check_branch
    %13 = sbr.rel (0) target = $region9
  $region8: #{baseline_forward.5} parent=0 // pred_region
    _
  $region9: #{baseline_forward.5} parent=0 // pred_fallthru
    _
  // Predicated region
  $region10: #{baseline_forward.5} parent=0 // pred_check
    _
  $region11: #{baseline_forward.5} parent=0 // pred_check_branch
    %15 = sbr.rel (0) target = $region13
  $region12: #{baseline_forward.5} parent=0 // pred_region
    _
  $region13: #{baseline_forward.5} parent=0 // pred_fallthru
    _
  // Predicated region
  $region14: #{baseline_forward.5} parent=0 // pred_check
    _
  $region15: #{baseline_forward.5} parent=0 // pred_check_branch
    %17 = sbr.rel (0) target = $region17
  $region16: #{baseline_forward.5} parent=0 // pred_region
    _
  $region17: #{baseline_forward.5} parent=0 // pred_fallthru
    _
  // Predicated region
  $region18: #{baseline_forward.5} parent=0 // pred_check
    _
  $region19: #{baseline_forward.5} parent=0 // pred_check_branch
    %19 = sbr.rel (0) target = $region21
  $region20: #{baseline_forward.5} parent=0 // pred_region
    _
  $region21: #{baseline_forward.5} parent=0 // pred_fallthru
    _
  %v20 = vld [vmem:[%s0] sm:$0xff]
  %v21 = vld [vmem:[%s0 + $0x8] sm:$0xff]
  %v22 = vld [vmem:[%s0 + $0x10] sm:$0xff]
  %v23 = vld [vmem:[%s0 + $0x18] sm:$0xff]
  %v24 = vld [vmem:[%s0 + $0x20] sm:$0xff]
  %v25 = vld [vmem:[%s0 + $0x28] sm:$0xff]
  %v26 = vld [vmem:[%s0 + $0x30] sm:$0xff]
  %v27 = vld [vmem:[%s0 + $0x38] sm:$0xff]
  %v28 = vld [vmem:[%s0 + $0x40] sm:$0xff]
  %v29 = vld [vmem:[%s0 + $0x48] sm:$0xff]
  %v30 = vld [vmem:[%s0 + $0x50] sm:$0xff]
  %v31 = vld [vmem:[%s0 + $0x58] sm:$0xff]
  %v32 = vld [vmem:[%s1] sm:$0xff]
  %v33 = vld [vmem:[%s1 + $0x8] sm:$0xff]
  %v34 = vld [vmem:[%s1 + $0x10] sm:$0xff]
  %v35 = vld [vmem:[%s1 + $0x18] sm:$0xff]
  %v36 = vld [vmem:[%s1 + $0x20] sm:$0xff]
  %v37 = vld [vmem:[%s1 + $0x28] sm:$0xff]
  %v38 = vld [vmem:[%s1 + $0x30] sm:$0xff]
  %v39 = vld [vmem:[%s1 + $0x38] sm:$0xff]
  %v40 = vld [vmem:[%s1 + $0x40] sm:$0xff]
  %v41 = vld [vmem:[%s1 + $0x48] sm:$0xff]
  %v42 = vld [vmem:[%s1 + $0x50] sm:$0xff]
  %v43 = vld [vmem:[%s1 + $0x58] sm:$0xff]
  %v44 = vld [vmem:[%s1 + $0x60] sm:$0xff]
  %v45 = vld [vmem:[%s1 + $0x68] sm:$0xff]
  %v46 = vld [vmem:[%s1 + $0x70] sm:$0xff]
  %v47 = vld [vmem:[%s1 + $0x78] sm:$0xff]
  %v48 = vld [vmem:[%s1 + $0x80] sm:$0xff]
  %v49 = vld [vmem:[%s1 + $0x88] sm:$0xff]
  %v50 = vld [vmem:[%s1 + $0x90] sm:$0xff]
  %v51 = vld [vmem:[%s1 + $0x98] sm:$0xff]
  %v52 = vld [vmem:[%s1 + $0xa0] sm:$0xff]
  %v53 = vld [vmem:[%s1 + $0xa8] sm:$0xff]
  %v54 = vld [vmem:[%s1 + $0xb0] sm:$0xff]
  %v55 = vld [vmem:[%s1 + $0xb8] sm:$0xff]
  %v56 = vld [vmem:[%s2] sm:$0x1]
  %v58 = vlaneseq
  %v59 = vshrl.u32 %v58, 7
  %v60 = vsub.s32 0, %v59
  %v61 = vrot.slane %v56, %v60
  %vm63 = vcmask 523264
  %v65 = vsel %vm63, %v21, 0
  %v68 = vsel %vm63, %v23, 0
  %v71 = vsel %vm63, %v25, 0
  %v74 = vsel %vm63, %v27, 0
  %v77 = vsel %vm63, %v29, 0
  %v80 = vsel %vm63, %v31, 0
  %82 = vmatprep.subr.mxu0 0.0
  %83 = vmatpush1.msra.mxu0 %v32
  %84 = vmatprep.subr.mxu0 0.0
  %85 = vmatpush1.msra.mxu0 %v33
  %86 = vmatprep.subr.mxu0 0.0
  %87 = vmatpush1.msra.mxu0 %v34
  %88 = vmatprep.subr.mxu0 0.0
  %89 = vmatpush1.msra.mxu0 %v35
  %90 = vmatprep.subr.mxu0 0.0
  %91 = vmatpush1.msra.mxu0 %v36
  %92 = vmatprep.subr.mxu0 0.0
  %93 = vmatpush1.msra.mxu0 %v37
  %94 = vmatprep.subr.mxu0 0.0
  %95 = vmatpush1.msra.mxu0 %v38
  %96 = vmatprep.subr.mxu0 0.0
  %97 = vmatpush1.msra.mxu0 %v39
  %98 = vmatprep.subr.mxu0 0.0
  %99 = vmatpush1.msra.mxu0 %v40
  %100 = vmatprep.subr.mxu0 0.0
  %101 = vmatpush1.msra.mxu0 %v41
  %102 = vmatprep.subr.mxu0 0.0
  %103 = vmatpush1.msra.mxu0 %v42
  %104 = vmatprep.subr.mxu0 0.0
  %105 = vmatpush1.msra.mxu0 %v43
  %106 = vmatprep.subr.mxu0 0.0
  %107 = vmatpush1.msra.mxu0 %v44
  %108 = vmatprep.subr.mxu0 0.0
  %109 = vmatpush1.msra.mxu0 %v45
  %110 = vmatprep.subr.mxu0 0.0
  %111 = vmatpush1.msra.mxu0 %v46
  %112 = vmatprep.subr.mxu0 0.0
  %113 = vmatpush1.msra.mxu0 %v47
  %114 = vmatprep.subr.mxu0 0.0
  %115 = vmatpush1.msra.mxu0 %v48
  %116 = vmatprep.subr.mxu0 0.0
  %117 = vmatpush1.msra.mxu0 %v49
  %118 = vmatprep.subr.mxu0 0.0
  %119 = vmatpush1.msra.mxu0 %v50
  %120 = vmatprep.subr.mxu0 0.0
  %121 = vmatpush1.msra.mxu0 %v51
  %122 = vmatprep.subr.mxu0 0.0
  %123 = vmatpush1.msra.mxu0 %v52
  %124 = vmatprep.subr.mxu0 0.0
  %125 = vmatpush1.msra.mxu0 %v53
  %126 = vmatprep.subr.mxu0 0.0
  %127 = vmatpush1.msra.mxu0 %v54
  %128 = vmatprep.subr.mxu0 0.0
  %129 = vmatpush1.msra.mxu0 %v55
  %130 = vmatprep.subr.mxu0 0.0
  %131 = vmatpush1.msra.mxu0 0.0
  %132 = vmatprep.subr.mxu0 0.0
  %133 = vmatpush1.msra.mxu0 0.0
  %134 = vmatprep.subr.mxu0 0.0
  %135 = vmatpush1.msra.mxu0 0.0
  %136 = vmatprep.subr.mxu0 0.0
  %137 = vmatpush1.msra.mxu0 0.0
  %138 = vmatprep.subr.mxu0 0.0
  %139 = vmatpush1.msra.mxu0 0.0
  %140 = vmatprep.subr.mxu0 0.0
  %141 = vmatpush1.msra.mxu0 0.0
  %142 = vmatprep.subr.mxu0 0.0
  %143 = vmatpush1.msra.mxu0 0.0
  %144 = vmatprep.subr.mxu0 0.0
  %145 = vmatpush1.msra.mxu0 0.0
  %146 = vmatprep.mubr.f32.mxu0 %v65
  %147 = vmatmul.mubr.f32.gmra.mrb[0].mxu0 %v20
  %v148 = vpop.f32.mrb[0].mxu0
  %v149 = vadd.f32 %v61, %v148
  %v150 = vpop.f32.mrb[0].mxu0
  %151 = vmatprep.mubr.f32.mxu0 %v68
  %152 = vmatmul.mubr.f32.gmra.mrb[0].mxu0 %v22
  %v153 = vpop.f32.mrb[0].mxu0
  %v154 = vadd.f32 %v61, %v153
  %v155 = vpop.f32.mrb[0].mxu0
  %156 = vmatprep.mubr.f32.mxu0 %v71
  %157 = vmatmul.mubr.f32.gmra.mrb[0].mxu0 %v24
  %v158 = vpop.f32.mrb[0].mxu0
  %v159 = vadd.f32 %v61, %v158
  %v160 = vpop.f32.mrb[0].mxu0
  %161 = vmatprep.mubr.f32.mxu0 %v74
  %162 = vmatmul.mubr.f32.gmra.mrb[0].mxu0 %v26
  %v163 = vpop.f32.mrb[0].mxu0
  %v164 = vadd.f32 %v61, %v163
  %v165 = vpop.f32.mrb[0].mxu0
  %166 = vmatprep.mubr.f32.mxu0 %v77
  %167 = vmatmul.mubr.f32.gmra.mrb[0].mxu0 %v28
  %v168 = vpop.f32.mrb[0].mxu0
  %v169 = vadd.f32 %v61, %v168
  %v170 = vpop.f32.mrb[0].mxu0
  %171 = vmatprep.mubr.f32.mxu0 %v80
  %172 = vmatmul.mubr.f32.gmra.mrb[0].mxu0 %v30
  %v173 = vpop.f32.mrb[0].mxu0
  %v174 = vadd.f32 %v61, %v173
  %v175 = vpop.f32.mrb[0].mxu0
  %176 = vdwg.mxu0
  %vm177 = vcmp.gt.f32.partialorder %v149, 0.0
  %vm178 = vcmp.gt.f32.partialorder %v154, 0.0
  %vm179 = vcmp.gt.f32.partialorder %v159, 0.0
  %vm180 = vcmp.gt.f32.partialorder %v164, 0.0
  %vm181 = vcmp.gt.f32.partialorder %v169, 0.0
  %vm182 = vcmp.gt.f32.partialorder %v174, 0.0
  %v183 = vmul.f32 %v149, 0.01
  %v184 = vmul.f32 %v154, 0.01
  %v185 = vmul.f32 %v159, 0.01
  %v186 = vmul.f32 %v164, 0.01
  %v187 = vmul.f32 %v169, 0.01
  %v188 = vmul.f32 %v174, 0.01
  %v189 = vsel %vm177, %v149, %v183
  %v190 = vsel %vm178, %v154, %v184
  %v191 = vsel %vm179, %v159, %v185
  %v192 = vsel %vm180, %v164, %v186
  %v193 = vsel %vm181, %v169, %v187
  %v194 = vsel %vm182, %v174, %v188
  %v195 = vld [vmem:[%s3] sm:$0x1]
  %v197 = vlaneseq
  %v198 = vshrl.u32 %v197, 7
  %v199 = vsub.s32 0, %v198
  %v200 = vrot.slane %v195, %v199
  %v202 = vmul.f32 %v189, %v200
  %v203 = vmul.f32 %v190, %v200
  %v204 = vmul.f32 %v191, %v200
  %v205 = vmul.f32 %v192, %v200
  %v206 = vmul.f32 %v193, %v200
  %v207 = vmul.f32 %v194, %v200
  %v208 = vld [vmem:[%s4] sm:$0x1]
  %v210 = vlaneseq
  %v211 = vshrl.u32 %v210, 7
  %v212 = vsub.s32 0, %v211
  %v213 = vrot.slane %v208, %v212
  %v215 = vadd.f32 %v202, %v213
  %v216 = vadd.f32 %v203, %v213
  %v217 = vadd.f32 %v204, %v213
  %v218 = vadd.f32 %v205, %v213
  %v219 = vadd.f32 %v206, %v213
  %v220 = vadd.f32 %v207, %v213
  %221 = vst [vmem:[%s5] sm:$0xff] %v215
  %222 = vst [vmem:[%s5 + $0x8] sm:$0xff] %v216
  %223 = vst [vmem:[%s5 + $0x10] sm:$0xff] %v217
  %224 = vst [vmem:[%s5 + $0x18] sm:$0xff] %v218
  %225 = vst [vmem:[%s5 + $0x20] sm:$0xff] %v219
  %226 = vst [vmem:[%s5 + $0x28] sm:$0xff] %v220
  // Predicated region
  $region22: #{baseline_forward.5} parent=0 // pred_check
    _
  $region23: #{baseline_forward.5} parent=0 // pred_check_branch
    %228 = sbr.rel (0) target = $region25
  $region24: #{baseline_forward.5} parent=0 // pred_region
    _
  $region25: #{baseline_forward.5} parent=0 // pred_fallthru
    _
  // Predicated region
  $region26: #{baseline_forward.5} parent=0 // pred_check
    _
  $region27: #{baseline_forward.5} parent=0 // pred_check_branch
    %230 = sbr.rel (0) target = $region29
  $region28: #{baseline_forward.5} parent=0 // pred_region
    _
  $region29: #{baseline_forward.5} parent=0 // pred_fallthru
    _

// kernel: baseline_forward.6
$region0: #{baseline_forward.6}
  #allocation0 [shape = 'u32[]', space=smem, size = 0x4, offset = 0x4, fixed_abs, tag = 'smem constant byte address 0x4 - core index']
  #allocation1 [shape = 'u32[144,128]{1,0:T(1,128)}', space=vmem, size = 0x12000, scoped, tag = 'internal scratch']
  %s0 = inlined_call_operand.vmem [shape: f32[44,384], index: 0, kind: input, shape index: {}]
  %s1 = inlined_call_operand.vmem [shape: f32[384,256], index: 1, kind: input, shape index: {}]
  %s2 = inlined_call_operand.vmem [shape: f32[1,256], index: 2, kind: input, shape index: {}]
  %s3 = inlined_call_operand.vmem [shape: f32[1,256], index: 3, kind: input, shape index: {}]
  %s4 = inlined_call_operand.vmem [shape: f32[1,256], index: 4, kind: input, shape index: {}]
  %s5 = inlined_call_operand.vmem [shape: f32[44,256], index: 5, kind: output, shape index: {}]
  %s6 = sld [smem:[#allocation0]]
  $region30: #{baseline_forward.6} parent=0
    _
  %s8 = ssub.s32 1, %s6
  %s9 = scalar_select 0, %s8, %s6
  // Predicated region
  $region2: #{baseline_forward.6} parent=0 // pred_check
    _
  $region3: #{baseline_forward.6} parent=0 // pred_check_branch
    %11 = sbr.rel (0) target = $region5
  $region4: #{baseline_forward.6} parent=0 // pred_region
    _
  $region5: #{baseline_forward.6} parent=0 // pred_fallthru
    _
  // Predicated region
  $region6: #{baseline_forward.6} parent=0 // pred_check
    _
  $region7: #{baseline_forward.6} parent=0 // pred_check_branch
    %13 = sbr.rel (0) target = $region9
  $region8: #{baseline_forward.6} parent=0 // pred_region
    _
  $region9: #{baseline_forward.6} parent=0 // pred_fallthru
    _
  // Predicated region
  $region10: #{baseline_forward.6} parent=0 // pred_check
    _
  $region11: #{baseline_forward.6} parent=0 // pred_check_branch
    %15 = sbr.rel (0) target = $region13
  $region12: #{baseline_forward.6} parent=0 // pred_region
    _
  $region13: #{baseline_forward.6} parent=0 // pred_fallthru
    _
  // Predicated region
  $region14: #{baseline_forward.6} parent=0 // pred_check
    _
  $region15: #{baseline_forward.6} parent=0 // pred_check_branch
    %17 = sbr.rel (0) target = $region17
  $region16: #{baseline_forward.6} parent=0 // pred_region
    _
  $region17: #{baseline_forward.6} parent=0 // pred_fallthru
    _
  // Predicated region
  $region18: #{baseline_forward.6} parent=0 // pred_check
    _
  $region19: #{baseline_forward.6} parent=0 // pred_check_branch
    %19 = sbr.rel (0) target = $region21
  $region20: #{baseline_forward.6} parent=0 // pred_region
    _
  $region21: #{baseline_forward.6} parent=0 // pred_fallthru
    _
  %v20 = vld [vmem:[%s0] sm:$0xff]
  %v21 = vld [vmem:[%s0 + $0x8] sm:$0xff]
  %v22 = vld [vmem:[%s0 + $0x10] sm:$0xff]
  %v23 = vld [vmem:[%s0 + $0x18] sm:$0xff]
  %v24 = vld [vmem:[%s0 + $0x20] sm:$0xff]
  %v25 = vld [vmem:[%s0 + $0x28] sm:$0xff]
  %v26 = vld [vmem:[%s0 + $0x30] sm:$0xff]
  %v27 = vld [vmem:[%s0 + $0x38] sm:$0xff]
  %v28 = vld [vmem:[%s0 + $0x40] sm:$0xff]
  %v29 = vld [vmem:[%s0 + $0x48] sm:$0xff]
  %v30 = vld [vmem:[%s0 + $0x50] sm:$0xff]
  %v31 = vld [vmem:[%s0 + $0x58] sm:$0xff]
  %v32 = vld [vmem:[%s0 + $0x60] sm:$0xff]
  %v33 = vld [vmem:[%s0 + $0x68] sm:$0xff]
  %v34 = vld [vmem:[%s0 + $0x70] sm:$0xff]
  %v35 = vld [vmem:[%s0 + $0x78] sm:$0xf]
  %v36 = vld [vmem:[%s0 + $0x80] sm:$0xf]
  %v37 = vld [vmem:[%s0 + $0x88] sm:$0xf]
  %v38 = vld [vmem:[%s1] sm:$0xff]
  %v39 = vld [vmem:[%s1 + $0x8] sm:$0xff]
  %v40 = vld [vmem:[%s1 + $0x10] sm:$0xff]
  %v41 = vld [vmem:[%s1 + $0x18] sm:$0xff]
  %v42 = vld [vmem:[%s1 + $0x20] sm:$0xff]
  %v43 = vld [vmem:[%s1 + $0x28] sm:$0xff]
  %v44 = vld [vmem:[%s1 + $0x30] sm:$0xff]
  %v45 = vld [vmem:[%s1 + $0x38] sm:$0xff]
  %v46 = vld [vmem:[%s1 + $0x40] sm:$0xff]
  %v47 = vld [vmem:[%s1 + $0x48] sm:$0xff]
  %v48 = vld [vmem:[%s1 + $0x50] sm:$0xff]
  %v49 = vld [vmem:[%s1 + $0x58] sm:$0xff]
  %v50 = vld [vmem:[%s1 + $0x60] sm:$0xff]
  %v51 = vld [vmem:[%s1 + $0x68] sm:$0xff]
  %v52 = vld [vmem:[%s1 + $0x70] sm:$0xff]
  %v53 = vld [vmem:[%s1 + $0x78] sm:$0xff]
  %v54 = vld [vmem:[%s1 + $0x80] sm:$0xff]
  %v55 = vld [vmem:[%s1 + $0x88] sm:$0xff]
  %v56 = vld [vmem:[%s1 + $0x90] sm:$0xff]
  %v57 = vld [vmem:[%s1 + $0x98] sm:$0xff]
  %v58 = vld [vmem:[%s1 + $0xa0] sm:$0xff]
  %v59 = vld [vmem:[%s1 + $0xa8] sm:$0xff]
  %v60 = vld [vmem:[%s1 + $0xb0] sm:$0xff]
  %v61 = vld [vmem:[%s1 + $0xb8] sm:$0xff]
  %v62 = vld [vmem:[%s1 + $0xc0] sm:$0xff]
  %v63 = vld [vmem:[%s1 + $0xc8] sm:$0xff]
  %v64 = vld [vmem:[%s1 + $0xd0] sm:$0xff]
  %v65 = vld [vmem:[%s1 + $0xd8] sm:$0xff]
  %v66 = vld [vmem:[%s1 + $0xe0] sm:$0xff]
  %v67 = vld [vmem:[%s1 + $0xe8] sm:$0xff]
  %v68 = vld [vmem:[%s1 + $0xf0] sm:$0xff]
  %v69 = vld [vmem:[%s1 + $0xf8] sm:$0xff]
  %v70 = vld [vmem:[%s1 + $0x100] sm:$0xff]
  %v71 = vld [vmem:[%s1 + $0x108] sm:$0xff]
  %v72 = vld [vmem:[%s1 + $0x110] sm:$0xff]
  %v73 = vld [vmem:[%s1 + $0x118] sm:$0xff]
  %v74 = vld [vmem:[%s1 + $0x120] sm:$0xff]
  %v75 = vld [vmem:[%s1 + $0x128] sm:$0xff]
  %v76 = vld [vmem:[%s1 + $0x130] sm:$0xff]
  %v77 = vld [vmem:[%s1 + $0x138] sm:$0xff]
  %v78 = vld [vmem:[%s1 + $0x140] sm:$0xff]
  %v79 = vld [vmem:[%s1 + $0x148] sm:$0xff]
  %v80 = vld [vmem:[%s1 + $0x150] sm:$0xff]
  %v81 = vld [vmem:[%s1 + $0x158] sm:$0xff]
  %v82 = vld [vmem:[%s1 + $0x160] sm:$0xff]
  %v83 = vld [vmem:[%s1 + $0x168] sm:$0xff]
  %v84 = vld [vmem:[%s1 + $0x170] sm:$0xff]
  %v85 = vld [vmem:[%s1 + $0x178] sm:$0xff]
  %v86 = vld [vmem:[%s1 + $0x180] sm:$0xff]
  %v87 = vld [vmem:[%s1 + $0x188] sm:$0xff]
  %v88 = vld [vmem:[%s1 + $0x190] sm:$0xff]
  %v89 = vld [vmem:[%s1 + $0x198] sm:$0xff]
  %v90 = vld [vmem:[%s1 + $0x1a0] sm:$0xff]
  %v91 = vld [vmem:[%s1 + $0x1a8] sm:$0xff]
  %v92 = vld [vmem:[%s1 + $0x1b0] sm:$0xff]
  %v93 = vld [vmem:[%s1 + $0x1b8] sm:$0xff]
  %v94 = vld [vmem:[%s1 + $0x1c0] sm:$0xff]
  %v95 = vld [vmem:[%s1 + $0x1c8] sm:$0xff]
  %v96 = vld [vmem:[%s1 + $0x1d0] sm:$0xff]
  %v97 = vld [vmem:[%s1 + $0x1d8] sm:$0xff]
  %v98 = vld [vmem:[%s1 + $0x1e0] sm:$0xff]
  %v99 = vld [vmem:[%s1 + $0x1e8] sm:$0xff]
  %v100 = vld [vmem:[%s1 + $0x1f0] sm:$0xff]
  %v101 = vld [vmem:[%s1 + $0x1f8] sm:$0xff]
  %v102 = vld [vmem:[%s1 + $0x200] sm:$0xff]
  %v103 = vld [vmem:[%s1 + $0x208] sm:$0xff]
  %v104 = vld [vmem:[%s1 + $0x210] sm:$0xff]
  %v105 = vld [vmem:[%s1 + $0x218] sm:$0xff]
  %v106 = vld [vmem:[%s1 + $0x220] sm:$0xff]
  %v107 = vld [vmem:[%s1 + $0x228] sm:$0xff]
  %v108 = vld [vmem:[%s1 + $0x230] sm:$0xff]
  %v109 = vld [vmem:[%s1 + $0x238] sm:$0xff]
  %v110 = vld [vmem:[%s1 + $0x240] sm:$0xff]
  %v111 = vld [vmem:[%s1 + $0x248] sm:$0xff]
  %v112 = vld [vmem:[%s1 + $0x250] sm:$0xff]
  %v113 = vld [vmem:[%s1 + $0x258] sm:$0xff]
  %v114 = vld [vmem:[%s1 + $0x260] sm:$0xff]
  %v115 = vld [vmem:[%s1 + $0x268] sm:$0xff]
  %v116 = vld [vmem:[%s1 + $0x270] sm:$0xff]
  %v117 = vld [vmem:[%s1 + $0x278] sm:$0xff]
  %v118 = vld [vmem:[%s1 + $0x280] sm:$0xff]
  %v119 = vld [vmem:[%s1 + $0x288] sm:$0xff]
  %v120 = vld [vmem:[%s1 + $0x290] sm:$0xff]
  %v121 = vld [vmem:[%s1 + $0x298] sm:$0xff]
  %v122 = vld [vmem:[%s1 + $0x2a0] sm:$0xff]
  %v123 = vld [vmem:[%s1 + $0x2a8] sm:$0xff]
  %v124 = vld [vmem:[%s1 + $0x2b0] sm:$0xff]
  %v125 = vld [vmem:[%s1 + $0x2b8] sm:$0xff]
  %v126 = vld [vmem:[%s1 + $0x2c0] sm:$0xff]
  %v127 = vld [vmem:[%s1 + $0x2c8] sm:$0xff]
  %v128 = vld [vmem:[%s1 + $0x2d0] sm:$0xff]
  %v129 = vld [vmem:[%s1 + $0x2d8] sm:$0xff]
  %v130 = vld [vmem:[%s1 + $0x2e0] sm:$0xff]
  %v131 = vld [vmem:[%s1 + $0x2e8] sm:$0xff]
  %v132 = vld [vmem:[%s1 + $0x2f0] sm:$0xff]
  %v133 = vld [vmem:[%s1 + $0x2f8] sm:$0xff]
  %v134 = vld [vmem:[%s2] sm:$0x3]
  %v136 = vlaneseq
  %v137 = vshrl.u32 %v136, 7
  %v138 = vsub.s32 0, %v137
  %v139 = vrot.slane %v134, %v138
  %v140 = vlaneseq
  %v141 = vshrl.u32 %v140, 7
  %v142 = vsub.s32 1, %v141
  %v143 = vrot.slane %v134, %v142
  %146 = vmatprep.subr.mxu0 %v39
  %147 = vmatpush1.msra.mxu0 %v38
  %148 = vmatprep.subr.mxu0 %v41
  %149 = vmatpush1.msra.mxu0 %v40
  %150 = vmatprep.subr.mxu0 %v43
  %151 = vmatpush1.msra.mxu0 %v42
  %152 = vmatprep.subr.mxu0 %v45
  %153 = vmatpush1.msra.mxu0 %v44
  %154 = vmatprep.subr.mxu0 %v47
  %155 = vmatpush1.msra.mxu0 %v46
  %156 = vmatprep.subr.mxu0 %v49
  %157 = vmatpush1.msra.mxu0 %v48
  %158 = vmatprep.subr.mxu0 %v51
  %159 = vmatpush1.msra.mxu0 %v50
  %160 = vmatprep.subr.mxu0 %v53
  %161 = vmatpush1.msra.mxu0 %v52
  %162 = vmatprep.subr.mxu0 %v55
  %163 = vmatpush1.msra.mxu0 %v54
  %164 = vmatprep.subr.mxu0 %v57
  %165 = vmatpush1.msra.mxu0 %v56
  %166 = vmatprep.subr.mxu0 %v59
  %167 = vmatpush1.msra.mxu0 %v58
  %168 = vmatprep.subr.mxu0 %v61
  %169 = vmatpush1.msra.mxu0 %v60
  %170 = vmatprep.subr.mxu0 %v63
  %171 = vmatpush1.msra.mxu0 %v62
  %172 = vmatprep.subr.mxu0 %v65
  %173 = vmatpush1.msra.mxu0 %v64
  %174 = vmatprep.subr.mxu0 %v67
  %175 = vmatpush1.msra.mxu0 %v66
  %176 = vmatprep.subr.mxu0 %v69
  %177 = vmatpush1.msra.mxu0 %v68
  %178 = vmatprep.subr.mxu0 %v71
  %179 = vmatpush1.msra.mxu0 %v70
  %180 = vmatprep.subr.mxu0 %v73
  %181 = vmatpush1.msra.mxu0 %v72
  %182 = vmatprep.subr.mxu0 %v75
  %183 = vmatpush1.msra.mxu0 %v74
  %184 = vmatprep.subr.mxu0 %v77
  %185 = vmatpush1.msra.mxu0 %v76
  %186 = vmatprep.subr.mxu0 %v79
  %187 = vmatpush1.msra.mxu0 %v78
  %188 = vmatprep.subr.mxu0 %v81
  %189 = vmatpush1.msra.mxu0 %v80
  %190 = vmatprep.subr.mxu0 %v83
  %191 = vmatpush1.msra.mxu0 %v82
  %192 = vmatprep.subr.mxu0 %v85
  %193 = vmatpush1.msra.mxu0 %v84
  %194 = vmatprep.subr.mxu0 %v87
  %195 = vmatpush1.msra.mxu0 %v86
  %196 = vmatprep.subr.mxu0 %v89
  %197 = vmatpush1.msra.mxu0 %v88
  %198 = vmatprep.subr.mxu0 %v91
  %199 = vmatpush1.msra.mxu0 %v90
  %200 = vmatprep.subr.mxu0 %v93
  %201 = vmatpush1.msra.mxu0 %v92
  %202 = vmatprep.subr.mxu0 %v95
  %203 = vmatpush1.msra.mxu0 %v94
  %204 = vmatprep.subr.mxu0 %v97
  %205 = vmatpush1.msra.mxu0 %v96
  %206 = vmatprep.subr.mxu0 %v99
  %207 = vmatpush1.msra.mxu0 %v98
  %208 = vmatprep.subr.mxu0 %v101
  %209 = vmatpush1.msra.mxu0 %v100
  %210 = vmatprep.mubr.f32.mxu0 %v21
  %211 = vmatmul.mubr.f32.gmra.mrb[0].mxu0 %v20
  %v212 = vpop.f32.mrb[0].mxu0
  %v213 = vadd.f32 %v139, %v212
  %v214 = vpop.f32.mrb[0].mxu0
  %v215 = vadd.f32 %v143, %v214
  %216 = vmatprep.mubr.f32.mxu0 %v24
  %217 = vmatmul.mubr.f32.gmra.mrb[0].mxu0 %v23
  %v218 = vpop.f32.mrb[0].mxu0
  %v219 = vadd.f32 %v139, %v218
  %v220 = vpop.f32.mrb[0].mxu0
  %v221 = vadd.f32 %v143, %v220
  %222 = vmatprep.mubr.f32.mxu0 %v27
  %223 = vmatmul.mubr.f32.gmra.mrb[0].mxu0 %v26
  %v224 = vpop.f32.mrb[0].mxu0
  %v225 = vadd.f32 %v139, %v224
  %v226 = vpop.f32.mrb[0].mxu0
  %v227 = vadd.f32 %v143, %v226
  %228 = vmatprep.mubr.f32.mxu0 %v30
  %229 = vmatmul.mubr.f32.gmra.mrb[0].mxu0 %v29
  %v230 = vpop.f32.mrb[0].mxu0
  %v231 = vadd.f32 %v139, %v230
  %v232 = vpop.f32.mrb[0].mxu0
  %v233 = vadd.f32 %v143, %v232
  %234 = vmatprep.mubr.f32.mxu0 %v33
  %235 = vmatmul.mubr.f32.gmra.mrb[0].mxu0 %v32
  %v236 = vpop.f32.mrb[0].mxu0
  %v237 = vadd.f32 %v139, %v236
  %v238 = vpop.f32.mrb[0].mxu0
  %v239 = vadd.f32 %v143, %v238
  %240 = vmatprep.mubr.f32.mxu0 %v36
  %241 = vmatmul.mubr.f32.gmra.mrb[0].mxu0 %v35
  %v242 = vpop.f32.mrb[0].mxu0
  %v243 = vadd.f32 %v139, %v242
  %v244 = vpop.f32.mrb[0].mxu0
  %v245 = vadd.f32 %v143, %v244
  %246 = vdwg.mxu0
  %247 = vmatprep.subr.mxu0 %v103
  %248 = vmatpush1.msra.mxu0 %v102
  %249 = vmatprep.subr.mxu0 %v105
  %250 = vmatpush1.msra.mxu0 %v104
  %251 = vmatprep.subr.mxu0 %v107
  %252 = vmatpush1.msra.mxu0 %v106
  %253 = vmatprep.subr.mxu0 %v109
  %254 = vmatpush1.msra.mxu0 %v108
  %255 = vmatprep.subr.mxu0 %v111
  %256 = vmatpush1.msra.mxu0 %v110
  %257 = vmatprep.subr.mxu0 %v113
  %258 = vmatpush1.msra.mxu0 %v112
  %259 = vmatprep.subr.mxu0 %v115
  %260 = vmatpush1.msra.mxu0 %v114
  %261 = vmatprep.subr.mxu0 %v117
  %262 = vmatpush1.msra.mxu0 %v116
  %263 = vmatprep.subr.mxu0 %v119
  %264 = vmatpush1.msra.mxu0 %v118
  %265 = vmatprep.subr.mxu0 %v121
  %266 = vmatpush1.msra.mxu0 %v120
  %267 = vmatprep.subr.mxu0 %v123
  %268 = vmatpush1.msra.mxu0 %v122
  %269 = vmatprep.subr.mxu0 %v125
  %270 = vmatpush1.msra.mxu0 %v124
  %271 = vmatprep.subr.mxu0 %v127
  %272 = vmatpush1.msra.mxu0 %v126
  %273 = vmatprep.subr.mxu0 %v129
  %274 = vmatpush1.msra.mxu0 %v128
  %275 = vmatprep.subr.mxu0 %v131
  %276 = vmatpush1.msra.mxu0 %v130
  %277 = vmatprep.subr.mxu0 %v133
  %278 = vmatpush1.msra.mxu0 %v132
  %279 = vmatprep.subr.mxu0 0.0
  %280 = vmatpush1.msra.mxu0 0.0
  %281 = vmatprep.subr.mxu0 0.0
  %282 = vmatpush1.msra.mxu0 0.0
  %283 = vmatprep.subr.mxu0 0.0
  %284 = vmatpush1.msra.mxu0 0.0
  %285 = vmatprep.subr.mxu0 0.0
  %286 = vmatpush1.msra.mxu0 0.0
  %287 = vmatprep.subr.mxu0 0.0
  %288 = vmatpush1.msra.mxu0 0.0
  %289 = vmatprep.subr.mxu0 0.0
  %290 = vmatpush1.msra.mxu0 0.0
  %291 = vmatprep.subr.mxu0 0.0
  %292 = vmatpush1.msra.mxu0 0.0
  %293 = vmatprep.subr.mxu0 0.0
  %294 = vmatpush1.msra.mxu0 0.0
  %295 = vmatprep.subr.mxu0 0.0
  %296 = vmatpush1.msra.mxu0 0.0
  %297 = vmatprep.subr.mxu0 0.0
  %298 = vmatpush1.msra.mxu0 0.0
  %299 = vmatprep.subr.mxu0 0.0
  %300 = vmatpush1.msra.mxu0 0.0
  %301 = vmatprep.subr.mxu0 0.0
  %302 = vmatpush1.msra.mxu0 0.0
  %303 = vmatprep.subr.mxu0 0.0
  %304 = vmatpush1.msra.mxu0 0.0
  %305 = vmatprep.subr.mxu0 0.0
  %306 = vmatpush1.msra.mxu0 0.0
  %307 = vmatprep.subr.mxu0 0.0
  %308 = vmatpush1.msra.mxu0 0.0
  %309 = vmatprep.subr.mxu0 0.0
  %310 = vmatpush1.msra.mxu0 0.0
  %311 = vmatprep.mubr.f32.mxu0 0.0
  %312 = vmatmul.mubr.f32.gmra.mrb[0].mxu0 %v22
  %v313 = vpop.f32.mrb[0].mxu0
  %v314 = vadd.f32 %v213, %v313
  %v315 = vpop.f32.mrb[0].mxu0
  %v316 = vadd.f32 %v215, %v315
  %317 = vmatprep.mubr.f32.mxu0 0.0
  %318 = vmatmul.mubr.f32.gmra.mrb[0].mxu0 %v25
  %v319 = vpop.f32.mrb[0].mxu0
  %v320 = vadd.f32 %v219, %v319
  %v321 = vpop.f32.mrb[0].mxu0
  %v322 = vadd.f32 %v221, %v321
  %323 = vmatprep.mubr.f32.mxu0 0.0
  %324 = vmatmul.mubr.f32.gmra.mrb[0].mxu0 %v28
  %v325 = vpop.f32.mrb[0].mxu0
  %v326 = vadd.f32 %v225, %v325
  %v327 = vpop.f32.mrb[0].mxu0
  %v328 = vadd.f32 %v227, %v327
  %329 = vmatprep.mubr.f32.mxu0 0.0
  %330 = vmatmul.mubr.f32.gmra.mrb[0].mxu0 %v31
  %v331 = vpop.f32.mrb[0].mxu0
  %v332 = vadd.f32 %v231, %v331
  %v333 = vpop.f32.mrb[0].mxu0
  %v334 = vadd.f32 %v233, %v333
  %335 = vmatprep.mubr.f32.mxu0 0.0
  %336 = vmatmul.mubr.f32.gmra.mrb[0].mxu0 %v34
  %v337 = vpop.f32.mrb[0].mxu0
  %v338 = vadd.f32 %v237, %v337
  %v339 = vpop.f32.mrb[0].mxu0
  %v340 = vadd.f32 %v239, %v339
  %341 = vmatprep.mubr.f32.mxu0 0.0
  %342 = vmatmul.mubr.f32.gmra.mrb[0].mxu0 %v37
  %v343 = vpop.f32.mrb[0].mxu0
  %v344 = vadd.f32 %v243, %v343
  %v345 = vpop.f32.mrb[0].mxu0
  %v346 = vadd.f32 %v245, %v345
  %347 = vdwg.mxu0
  %vm348 = vcmp.gt.f32.partialorder %v314, 0.0
  %vm349 = vcmp.gt.f32.partialorder %v316, 0.0
  %vm350 = vcmp.gt.f32.partialorder %v320, 0.0
  %vm351 = vcmp.gt.f32.partialorder %v322, 0.0
  %vm352 = vcmp.gt.f32.partialorder %v326, 0.0
  %vm353 = vcmp.gt.f32.partialorder %v328, 0.0
  %vm354 = vcmp.gt.f32.partialorder %v332, 0.0
  %vm355 = vcmp.gt.f32.partialorder %v334, 0.0
  %vm356 = vcmp.gt.f32.partialorder %v338, 0.0
  %vm357 = vcmp.gt.f32.partialorder %v340, 0.0
  %vm358 = vcmp.gt.f32.partialorder %v344, 0.0
  %vm359 = vcmp.gt.f32.partialorder %v346, 0.0
  %v360 = vmul.f32 %v314, 0.01
  %v361 = vmul.f32 %v316, 0.01
  %v362 = vmul.f32 %v320, 0.01
  %v363 = vmul.f32 %v322, 0.01
  %v364 = vmul.f32 %v326, 0.01
  %v365 = vmul.f32 %v328, 0.01
  %v366 = vmul.f32 %v332, 0.01
  %v367 = vmul.f32 %v334, 0.01
  %v368 = vmul.f32 %v338, 0.01
  %v369 = vmul.f32 %v340, 0.01
  %v370 = vmul.f32 %v344, 0.01
  %v371 = vmul.f32 %v346, 0.01
  %v372 = vsel %vm348, %v314, %v360
  %v373 = vsel %vm349, %v316, %v361
  %v374 = vsel %vm350, %v320, %v362
  %v375 = vsel %vm351, %v322, %v363
  %v376 = vsel %vm352, %v326, %v364
  %v377 = vsel %vm353, %v328, %v365
  %v378 = vsel %vm354, %v332, %v366
  %v379 = vsel %vm355, %v334, %v367
  %v380 = vsel %vm356, %v338, %v368
  %v381 = vsel %vm357, %v340, %v369
  %v382 = vsel %vm358, %v344, %v370
  %v383 = vsel %vm359, %v346, %v371
  %v384 = vld [vmem:[%s3] sm:$0x3]
  %v386 = vlaneseq
  %v387 = vshrl.u32 %v386, 7
  %v388 = vsub.s32 0, %v387
  %v389 = vrot.slane %v384, %v388
  %v390 = vlaneseq
  %v391 = vshrl.u32 %v390, 7
  %v392 = vsub.s32 1, %v391
  %v393 = vrot.slane %v384, %v392
  %v396 = vmul.f32 %v372, %v389
  %v397 = vmul.f32 %v373, %v393
  %v398 = vmul.f32 %v374, %v389
  %v399 = vmul.f32 %v375, %v393
  %v400 = vmul.f32 %v376, %v389
  %v401 = vmul.f32 %v377, %v393
  %v402 = vmul.f32 %v378, %v389
  %v403 = vmul.f32 %v379, %v393
  %v404 = vmul.f32 %v380, %v389
  %v405 = vmul.f32 %v381, %v393
  %v406 = vmul.f32 %v382, %v389
  %v407 = vmul.f32 %v383, %v393
  %v408 = vld [vmem:[%s4] sm:$0x3]
  %v410 = vlaneseq
  %v411 = vshrl.u32 %v410, 7
  %v412 = vsub.s32 0, %v411
  %v413 = vrot.slane %v408, %v412
  %v414 = vlaneseq
  %v415 = vshrl.u32 %v414, 7
  %v416 = vsub.s32 1, %v415
  %v417 = vrot.slane %v408, %v416
  %v420 = vadd.f32 %v396, %v413
  %v421 = vadd.f32 %v397, %v417
  %v422 = vadd.f32 %v398, %v413
  %v423 = vadd.f32 %v399, %v417
  %v424 = vadd.f32 %v400, %v413
  %v425 = vadd.f32 %v401, %v417
  %v426 = vadd.f32 %v402, %v413
  %v427 = vadd.f32 %v403, %v417
  %v428 = vadd.f32 %v404, %v413
  %v429 = vadd.f32 %v405, %v417
  %v430 = vadd.f32 %v406, %v413
  %v431 = vadd.f32 %v407, %v417
  %432 = vst [vmem:[%s5] sm:$0xff] %v420
  %433 = vst [vmem:[%s5 + $0x8] sm:$0xff] %v421
  %434 = vst [vmem:[%s5 + $0x10] sm:$0xff] %v422
  %435 = vst [vmem:[%s5 + $0x18] sm:$0xff] %v423
  %436 = vst [vmem:[%s5 + $0x20] sm:$0xff] %v424
  %437 = vst [vmem:[%s5 + $0x28] sm:$0xff] %v425
  %438 = vst [vmem:[%s5 + $0x30] sm:$0xff] %v426
  %439 = vst [vmem:[%s5 + $0x38] sm:$0xff] %v427
  %440 = vst [vmem:[%s5 + $0x40] sm:$0xff] %v428
  %441 = vst [vmem:[%s5 + $0x48] sm:$0xff] %v429
  %442 = vst [vmem:[%s5 + $0x50] sm:$0xf] %v430
  %443 = vst [vmem:[%s5 + $0x58] sm:$0xf] %v431
  // Predicated region
  $region22: #{baseline_forward.6} parent=0 // pred_check
    _
  $region23: #{baseline_forward.6} parent=0 // pred_check_branch
    %445 = sbr.rel (0) target = $region25
  $region24: #{baseline_forward.6} parent=0 // pred_region
    _
  $region25: #{baseline_forward.6} parent=0 // pred_fallthru
    _
  // Predicated region
  $region26: #{baseline_forward.6} parent=0 // pred_check
    _
  $region27: #{baseline_forward.6} parent=0 // pred_check_branch
    %447 = sbr.rel (0) target = $region29
  $region28: #{baseline_forward.6} parent=0 // pred_region
    _
  $region29: #{baseline_forward.6} parent=0 // pred_fallthru
    _

// kernel: baseline_forward.7
$region0: #{baseline_forward.7}
  #allocation0 [shape = 'u32[]', space=smem, size = 0x4, offset = 0x4, fixed_abs, tag = 'smem constant byte address 0x4 - core index']
  #allocation1 [shape = 'u32[144,128]{1,0:T(1,128)}', space=vmem, size = 0x12000, scoped, tag = 'internal scratch']
  %s0 = inlined_call_operand.vmem [shape: bf16[2,5632], index: 0, kind: input, shape index: {}]
  %s1 = inlined_call_operand.vmem [shape: bf16[22,5632], index: 1, kind: input, shape index: {}]
  %s2 = inlined_call_operand.vmem [shape: f32[1,22], index: 2, kind: input, shape index: {}]
  %s3 = inlined_call_operand.hbm [shape: f32[2,22], index: 3, kind: output, shape index: {}]
  %s4 = sld [smem:[#allocation0]]
  $region22: #{baseline_forward.7} parent=0
    _
  %s6 = ssub.s32 1, %s4
  %s7 = scalar_select 0, %s6, %s4
  $region1: #{baseline_forward.7} parent=0
    #allocation2 [shape = 'u8[1024]{0}', space=vmem, size = 0x400, scoped, tag = 'output window, operand 0, single buffered']
    #allocation3 [shape = 's32[1]{0}', space=sflag, size = 0x4, scoped, tag = 'scoped memory for baseline_forward.7']
    %8 = vsyncpa [#allocation3], 0
    // Predicated region
    $region2: #{baseline_forward.7} parent=1 // pred_check
      _
    $region3: #{baseline_forward.7} parent=1 // pred_check_branch
      %10 = sbr.rel (0) target = $region5
    $region4: #{baseline_forward.7} parent=1 // pred_region
      _
    $region5: #{baseline_forward.7} parent=1 // pred_fallthru
      _
    // Predicated region
    $region6: #{baseline_forward.7} parent=1 // pred_check
      _
    $region7: #{baseline_forward.7} parent=1 // pred_check_branch
      %12 = sbr.rel (0) target = $region9
    $region8: #{baseline_forward.7} parent=1 // pred_region
      _
    $region9: #{baseline_forward.7} parent=1 // pred_fallthru
      _
    // Predicated region
    $region10: #{baseline_forward.7} parent=1 // pred_check
      _
    $region11: #{baseline_forward.7} parent=1 // pred_check_branch
      %14 = sbr.rel (0) target = $region13
    $region12: #{baseline_forward.7} parent=1 // pred_region
      _
    $region13: #{baseline_forward.7} parent=1 // pred_fallthru
      _
    %v16 = vld [vmem:[%s0] sm:$0xff]
    %v17 = vld [vmem:[%s0 + $0x8] sm:$0xff]
    %v18 = vld [vmem:[%s0 + $0x10] sm:$0xff]
    %v19 = vld [vmem:[%s0 + $0x18] sm:$0xff]
    %v20 = vld [vmem:[%s0 + $0x20] sm:$0xff]
    %v21 = vld [vmem:[%s0 + $0x28] sm:$0xf]
    %v22 = vld [vmem:[%s1] sm:$0xff]
    %v23 = vld [vmem:[%s1 + $0x8] sm:$0xff]
    %v24 = vld [vmem:[%s1 + $0x10] sm:$0xff]
    %v25 = vld [vmem:[%s1 + $0x18] sm:$0xff]
    %v26 = vld [vmem:[%s1 + $0x20] sm:$0xff]
    %v27 = vld [vmem:[%s1 + $0x28] sm:$0xff]
    %v28 = vld [vmem:[%s1 + $0x30] sm:$0xff]
    %v29 = vld [vmem:[%s1 + $0x38] sm:$0xff]
    %v30 = vld [vmem:[%s1 + $0x40] sm:$0xff]
    %v31 = vld [vmem:[%s1 + $0x48] sm:$0xff]
    %v32 = vld [vmem:[%s1 + $0x50] sm:$0xff]
    %v33 = vld [vmem:[%s1 + $0x58] sm:$0xff]
    %v34 = vld [vmem:[%s1 + $0x60] sm:$0xff]
    %v35 = vld [vmem:[%s1 + $0x68] sm:$0xff]
    %v36 = vld [vmem:[%s1 + $0x70] sm:$0xff]
    %v37 = vld [vmem:[%s1 + $0x78] sm:$0xff]
    %v38 = vld [vmem:[%s1 + $0x80] sm:$0xff]
    %v39 = vld [vmem:[%s1 + $0x88] sm:$0xff]
    %v40 = vld [vmem:[%s1 + $0x90] sm:$0xff]
    %v41 = vld [vmem:[%s1 + $0x98] sm:$0xff]
    %v42 = vld [vmem:[%s1 + $0xa0] sm:$0xff]
    %v43 = vld [vmem:[%s1 + $0xa8] sm:$0xff]
    %v44 = vld [vmem:[%s1 + $0xb0] sm:$0xff]
    %v45 = vld [vmem:[%s1 + $0xb8] sm:$0xff]
    %v46 = vld [vmem:[%s1 + $0xc0] sm:$0xff]
    %v47 = vld [vmem:[%s1 + $0xc8] sm:$0xff]
    %v48 = vld [vmem:[%s1 + $0xd0] sm:$0xff]
    %v49 = vld [vmem:[%s1 + $0xd8] sm:$0xff]
    %v50 = vld [vmem:[%s1 + $0xe0] sm:$0xff]
    %v51 = vld [vmem:[%s1 + $0xe8] sm:$0xff]
    %v52 = vld [vmem:[%s1 + $0xf0] sm:$0xff]
    %v53 = vld [vmem:[%s1 + $0xf8] sm:$0xff]
    %v54 = vld [vmem:[%s1 + $0x100] sm:$0xff]
    %v55 = vld [vmem:[%s1 + $0x108] sm:$0xff]
    %v56 = vld [vmem:[%s1 + $0x110] sm:$0xff]
    %v57 = vld [vmem:[%s1 + $0x118] sm:$0xff]
    %v58 = vld [vmem:[%s1 + $0x120] sm:$0xff]
    %v59 = vld [vmem:[%s1 + $0x128] sm:$0xff]
    %v60 = vld [vmem:[%s1 + $0x130] sm:$0xff]
    %v61 = vld [vmem:[%s1 + $0x138] sm:$0xff]
    %v62 = vld [vmem:[%s1 + $0x140] sm:$0xff]
    %v63 = vld [vmem:[%s1 + $0x148] sm:$0xff]
    %v64 = vld [vmem:[%s1 + $0x150] sm:$0xff]
    %v65 = vld [vmem:[%s1 + $0x158] sm:$0xff]
    %v66 = vld [vmem:[%s1 + $0x160] sm:$0x77]
    %v67 = vld [vmem:[%s1 + $0x168] sm:$0x77]
    %v68 = vld [vmem:[%s1 + $0x170] sm:$0x77]
    %v69 = vld [vmem:[%s1 + $0x178] sm:$0x77]
    %v70 = vld [vmem:[%s1 + $0x180] sm:$0x77]
    %v71 = vld [vmem:[%s1 + $0x188] sm:$0x77]
    %v72 = vld [vmem:[%s1 + $0x190] sm:$0x77]
    %v73 = vld [vmem:[%s1 + $0x198] sm:$0x77]
    %v74 = vld [vmem:[%s1 + $0x1a0] sm:$0x77]
    %v75 = vld [vmem:[%s1 + $0x1a8] sm:$0x77]
    %v76 = vld [vmem:[%s1 + $0x1b0] sm:$0x77]
    %v77 = vld [vmem:[%s1 + $0x1b8] sm:$0x77]
    %v78 = vld [vmem:[%s1 + $0x1c0] sm:$0x77]
    %v79 = vld [vmem:[%s1 + $0x1c8] sm:$0x77]
    %v80 = vld [vmem:[%s1 + $0x1d0] sm:$0x77]
    %v81 = vld [vmem:[%s1 + $0x1d8] sm:$0x77]
    %v82 = vld [vmem:[%s1 + $0x1e0] sm:$0x77]
    %v83 = vld [vmem:[%s1 + $0x1e8] sm:$0x77]
    %v84 = vld [vmem:[%s1 + $0x1f0] sm:$0x77]
    %v85 = vld [vmem:[%s1 + $0x1f8] sm:$0x77]
    %v86 = vld [vmem:[%s1 + $0x200] sm:$0x77]
    %v87 = vld [vmem:[%s1 + $0x208] sm:$0x77]
    %v88 = vld [vmem:[%s2] sm:$0x1]
    %v90 = vlaneseq
    %v91 = vshrl.u32 %v90, 7
    %v92 = vsub.s32 0, %v91
    %v93 = vrot.slane %v88, %v92
    %v101 = vcombine.high %v16, %v16
    %v103 = vunpack.c.l.s4 1966171168
    %v104 = vunpack.c.0.s8 %v103
    %v105 = vlaneseq
    %v106 = vshrl.u32 %v105, 7
    %v107 = vsub.s32 %v104, %v106
    %v108 = vrot.slane %v16, %v107
    %v110 = vunpack.c.l.s4 1966171168
    %v111 = vunpack.c.0.s8 %v110
    %v112 = vlaneseq
    %v113 = vshrl.u32 %v112, 7
    %v114 = vsub.s32 %v111, %v113
    %v115 = vrot.slane %v101, %v114
    %v116 = vcombine.high %v108, %v108
    %v117 = vcombine.high %v115, %v115
    %v119 = vunpack.c.l.s4 1966171168
    %v120 = vunpack.c.0.s8 %v119
    %v121 = vlaneseq
    %v122 = vshrl.u32 %v121, 7
    %v123 = vsub.s32 %v120, %v122
    %v124 = vrot.slane %v108, %v123
    %v126 = vunpack.c.l.s4 1966171168
    %v127 = vunpack.c.0.s8 %v126
    %v128 = vlaneseq
    %v129 = vshrl.u32 %v128, 7
    %v130 = vsub.s32 %v127, %v129
    %v131 = vrot.slane %v115, %v130
    %v133 = vunpack.c.l.s4 1966171168
    %v134 = vunpack.c.0.s8 %v133
    %v135 = vlaneseq
    %v136 = vshrl.u32 %v135, 7
    %v137 = vsub.s32 %v134, %v136
    %v138 = vrot.slane %v116, %v137
    %v140 = vunpack.c.l.s4 1966171168
    %v141 = vunpack.c.0.s8 %v140
    %v142 = vlaneseq
    %v143 = vshrl.u32 %v142, 7
    %v144 = vsub.s32 %v141, %v143
    %v145 = vrot.slane %v117, %v144
    %v146 = vcombine.high %v124, %v124
    %v147 = vcombine.high %v131, %v131
    %v148 = vcombine.high %v138, %v138
    %v149 = vcombine.high %v145, %v145
    %v150 = vcombine.high %v17, %v17
    %v152 = vunpack.c.l.s4 1966171168
    %v153 = vunpack.c.0.s8 %v152
    %v154 = vlaneseq
    %v155 = vshrl.u32 %v154, 7
    %v156 = vsub.s32 %v153, %v155
    %v157 = vrot.slane %v17, %v156
    %v159 = vunpack.c.l.s4 1966171168
    %v160 = vunpack.c.0.s8 %v159
    %v161 = vlaneseq
    %v162 = vshrl.u32 %v161, 7
    %v163 = vsub.s32 %v160, %v162
    %v164 = vrot.slane %v150, %v163
    %v165 = vcombine.high %v157, %v157
    %v166 = vcombine.high %v164, %v164
    %v168 = vunpack.c.l.s4 1966171168
    %v169 = vunpack.c.0.s8 %v168
    %v170 = vlaneseq
    %v171 = vshrl.u32 %v170, 7
    %v172 = vsub.s32 %v169, %v171
    %v173 = vrot.slane %v157, %v172
    %v175 = vunpack.c.l.s4 1966171168
    %v176 = vunpack.c.0.s8 %v175
    %v177 = vlaneseq
    %v178 = vshrl.u32 %v177, 7
    %v179 = vsub.s32 %v176, %v178
    %v180 = vrot.slane %v164, %v179
    %v182 = vunpack.c.l.s4 1966171168
    %v183 = vunpack.c.0.s8 %v182
    %v184 = vlaneseq
    %v185 = vshrl.u32 %v184, 7
    %v186 = vsub.s32 %v183, %v185
    %v187 = vrot.slane %v165, %v186
    %v189 = vunpack.c.l.s4 1966171168
    %v190 = vunpack.c.0.s8 %v189
    %v191 = vlaneseq
    %v192 = vshrl.u32 %v191, 7
    %v193 = vsub.s32 %v190, %v192
    %v194 = vrot.slane %v166, %v193
    %v195 = vcombine.high %v173, %v173
    %v196 = vcombine.high %v180, %v180
    %v197 = vcombine.high %v187, %v187
    %v198 = vcombine.high %v194, %v194
    %v199 = vcombine.high %v18, %v18
    %v201 = vunpack.c.l.s4 1966171168
    %v202 = vunpack.c.0.s8 %v201
    %v203 = vlaneseq
    %v204 = vshrl.u32 %v203, 7
    %v205 = vsub.s32 %v202, %v204
    %v206 = vrot.slane %v18, %v205
    %v208 = vunpack.c.l.s4 1966171168
    %v209 = vunpack.c.0.s8 %v208
    %v210 = vlaneseq
    %v211 = vshrl.u32 %v210, 7
    %v212 = vsub.s32 %v209, %v211
    %v213 = vrot.slane %v199, %v212
    %v214 = vcombine.high %v206, %v206
    %v215 = vcombine.high %v213, %v213
    %v217 = vunpack.c.l.s4 1966171168
    %v218 = vunpack.c.0.s8 %v217
    %v219 = vlaneseq
    %v220 = vshrl.u32 %v219, 7
    %v221 = vsub.s32 %v218, %v220
    %v222 = vrot.slane %v206, %v221
    %v224 = vunpack.c.l.s4 1966171168
    %v225 = vunpack.c.0.s8 %v224
    %v226 = vlaneseq
    %v227 = vshrl.u32 %v226, 7
    %v228 = vsub.s32 %v225, %v227
    %v229 = vrot.slane %v213, %v228
    %v231 = vunpack.c.l.s4 1966171168
    %v232 = vunpack.c.0.s8 %v231
    %v233 = vlaneseq
    %v234 = vshrl.u32 %v233, 7
    %v235 = vsub.s32 %v232, %v234
    %v236 = vrot.slane %v214, %v235
    %v238 = vunpack.c.l.s4 1966171168
    %v239 = vunpack.c.0.s8 %v238
    %v240 = vlaneseq
    %v241 = vshrl.u32 %v240, 7
    %v242 = vsub.s32 %v239, %v241
    %v243 = vrot.slane %v215, %v242
    %v244 = vcombine.high %v222, %v222
    %v245 = vcombine.high %v229, %v229
    %v246 = vcombine.high %v236, %v236
    %v247 = vcombine.high %v243, %v243
    %v248 = vcombine.high %v19, %v19
    %v250 = vunpack.c.l.s4 1966171168
    %v251 = vunpack.c.0.s8 %v250
    %v252 = vlaneseq
    %v253 = vshrl.u32 %v252, 7
    %v254 = vsub.s32 %v251, %v253
    %v255 = vrot.slane %v19, %v254
    %v257 = vunpack.c.l.s4 1966171168
    %v258 = vunpack.c.0.s8 %v257
    %v259 = vlaneseq
    %v260 = vshrl.u32 %v259, 7
    %v261 = vsub.s32 %v258, %v260
    %v262 = vrot.slane %v248, %v261
    %v263 = vcombine.high %v255, %v255
    %v264 = vcombine.high %v262, %v262
    %v266 = vunpack.c.l.s4 1966171168
    %v267 = vunpack.c.0.s8 %v266
    %v268 = vlaneseq
    %v269 = vshrl.u32 %v268, 7
    %v270 = vsub.s32 %v267, %v269
    %v271 = vrot.slane %v255, %v270
    %v273 = vunpack.c.l.s4 1966171168
    %v274 = vunpack.c.0.s8 %v273
    %v275 = vlaneseq
    %v276 = vshrl.u32 %v275, 7
    %v277 = vsub.s32 %v274, %v276
    %v278 = vrot.slane %v262, %v277
    %v280 = vunpack.c.l.s4 1966171168
    %v281 = vunpack.c.0.s8 %v280
    %v282 = vlaneseq
    %v283 = vshrl.u32 %v282, 7
    %v284 = vsub.s32 %v281, %v283
    %v285 = vrot.slane %v263, %v284
    %v287 = vunpack.c.l.s4 1966171168
    %v288 = vunpack.c.0.s8 %v287
    %v289 = vlaneseq
    %v290 = vshrl.u32 %v289, 7
    %v291 = vsub.s32 %v288, %v290
    %v292 = vrot.slane %v264, %v291
    %v293 = vcombine.high %v271, %v271
    %v294 = vcombine.high %v278, %v278
    %v295 = vcombine.high %v285, %v285
    %v296 = vcombine.high %v292, %v292
    %v297 = vcombine.high %v20, %v20
    %v299 = vunpack.c.l.s4 1966171168
    %v300 = vunpack.c.0.s8 %v299
    %v301 = vlaneseq
    %v302 = vshrl.u32 %v301, 7
    %v303 = vsub.s32 %v300, %v302
    %v304 = vrot.slane %v20, %v303
    %v306 = vunpack.c.l.s4 1966171168
    %v307 = vunpack.c.0.s8 %v306
    %v308 = vlaneseq
    %v309 = vshrl.u32 %v308, 7
    %v310 = vsub.s32 %v307, %v309
    %v311 = vrot.slane %v297, %v310
    %v312 = vcombine.high %v304, %v304
    %v313 = vcombine.high %v311, %v311
    %v315 = vunpack.c.l.s4 1966171168
    %v316 = vunpack.c.0.s8 %v315
    %v317 = vlaneseq
    %v318 = vshrl.u32 %v317, 7
    %v319 = vsub.s32 %v316, %v318
    %v320 = vrot.slane %v304, %v319
    %v322 = vunpack.c.l.s4 1966171168
    %v323 = vunpack.c.0.s8 %v322
    %v324 = vlaneseq
    %v325 = vshrl.u32 %v324, 7
    %v326 = vsub.s32 %v323, %v325
    %v327 = vrot.slane %v311, %v326
    %v329 = vunpack.c.l.s4 1966171168
    %v330 = vunpack.c.0.s8 %v329
    %v331 = vlaneseq
    %v332 = vshrl.u32 %v331, 7
    %v333 = vsub.s32 %v330, %v332
    %v334 = vrot.slane %v312, %v333
    %v336 = vunpack.c.l.s4 1966171168
    %v337 = vunpack.c.0.s8 %v336
    %v338 = vlaneseq
    %v339 = vshrl.u32 %v338, 7
    %v340 = vsub.s32 %v337, %v339
    %v341 = vrot.slane %v313, %v340
    %v342 = vcombine.high %v320, %v320
    %v343 = vcombine.high %v327, %v327
    %v344 = vcombine.high %v334, %v334
    %v345 = vcombine.high %v341, %v341
    %v347 = vunpack.c.l.s4 1966171168
    %v348 = vunpack.c.0.s8 %v347
    %v349 = vlaneseq
    %v350 = vshrl.u32 %v349, 7
    %v351 = vsub.s32 %v348, %v350
    %v352 = vrot.slane %v21, %v351
    %v353 = vcombine.high %v352, %v352
    %v355 = vunpack.c.l.s4 1966171168
    %v356 = vunpack.c.0.s8 %v355
    %v357 = vlaneseq
    %v358 = vshrl.u32 %v357, 7
    %v359 = vsub.s32 %v356, %v358
    %v360 = vrot.slane %v352, %v359
    %v362 = vunpack.c.l.s4 1966171168
    %v363 = vunpack.c.0.s8 %v362
    %v364 = vlaneseq
    %v365 = vshrl.u32 %v364, 7
    %v366 = vsub.s32 %v363, %v365
    %v367 = vrot.slane %v353, %v366
    %v368 = vcombine.high %v360, %v360
    %v369 = vcombine.high %v367, %v367
    %v480 = vunpack.c.l.b16 %v22
    %v481 = vunpack.c.h.b16 %v22
    %v482 = vunpack.c.l.b16 %v23
    %v483 = vunpack.c.h.b16 %v23
    %v484 = vunpack.c.l.b16 %v24
    %v485 = vunpack.c.h.b16 %v24
    %v486 = vunpack.c.l.b16 %v25
    %v487 = vunpack.c.h.b16 %v25
    %v488 = vunpack.c.l.b16 %v26
    %v489 = vunpack.c.h.b16 %v26
    %v490 = vunpack.c.l.b16 %v27
    %v491 = vunpack.c.h.b16 %v27
    %v492 = vunpack.c.l.b16 %v28
    %v493 = vunpack.c.h.b16 %v28
    %v494 = vunpack.c.l.b16 %v29
    %v495 = vunpack.c.h.b16 %v29
    %v496 = vunpack.c.l.b16 %v30
    %v497 = vunpack.c.h.b16 %v30
    %v498 = vunpack.c.l.b16 %v31
    %v499 = vunpack.c.h.b16 %v31
    %v500 = vunpack.c.l.b16 %v32
    %v501 = vunpack.c.h.b16 %v32
    %v502 = vunpack.c.l.b16 %v33
    %v503 = vunpack.c.h.b16 %v33
    %v504 = vunpack.c.l.b16 %v34
    %v505 = vunpack.c.h.b16 %v34
    %v506 = vunpack.c.l.b16 %v35
    %v507 = vunpack.c.h.b16 %v35
    %v508 = vunpack.c.l.b16 %v36
    %v509 = vunpack.c.h.b16 %v36
    %v510 = vunpack.c.l.b16 %v37
    %v511 = vunpack.c.h.b16 %v37
    %v512 = vunpack.c.l.b16 %v38
    %v513 = vunpack.c.h.b16 %v38
    %v514 = vunpack.c.l.b16 %v39
    %v515 = vunpack.c.h.b16 %v39
    %v516 = vunpack.c.l.b16 %v40
    %v517 = vunpack.c.h.b16 %v40
    %v518 = vunpack.c.l.b16 %v41
    %v519 = vunpack.c.h.b16 %v41
    %v520 = vunpack.c.l.b16 %v42
    %v521 = vunpack.c.h.b16 %v42
    %v522 = vunpack.c.l.b16 %v43
    %v523 = vunpack.c.h.b16 %v43
    %v524 = vunpack.c.l.b16 %v44
    %v525 = vunpack.c.h.b16 %v44
    %v526 = vunpack.c.l.b16 %v45
    %v527 = vunpack.c.h.b16 %v45
    %v528 = vunpack.c.l.b16 %v46
    %v529 = vunpack.c.h.b16 %v46
    %v530 = vunpack.c.l.b16 %v47
    %v531 = vunpack.c.h.b16 %v47
    %v532 = vunpack.c.l.b16 %v48
    %v533 = vunpack.c.h.b16 %v48
    %v534 = vunpack.c.l.b16 %v49
    %v535 = vunpack.c.h.b16 %v49
    %v536 = vunpack.c.l.b16 %v50
    %v537 = vunpack.c.h.b16 %v50
    %v538 = vunpack.c.l.b16 %v51
    %v539 = vunpack.c.h.b16 %v51
    %v540 = vunpack.c.l.b16 %v52
    %v541 = vunpack.c.h.b16 %v52
    %v542 = vunpack.c.l.b16 %v53
    %v543 = vunpack.c.h.b16 %v53
    %v544 = vunpack.c.l.b16 %v54
    %v545 = vunpack.c.h.b16 %v54
    %v546 = vunpack.c.l.b16 %v55
    %v547 = vunpack.c.h.b16 %v55
    %v548 = vunpack.c.l.b16 %v56
    %v549 = vunpack.c.h.b16 %v56
    %v550 = vunpack.c.l.b16 %v57
    %v551 = vunpack.c.h.b16 %v57
    %v552 = vunpack.c.l.b16 %v58
    %v553 = vunpack.c.h.b16 %v58
    %v554 = vunpack.c.l.b16 %v59
    %v555 = vunpack.c.h.b16 %v59
    %v556 = vunpack.c.l.b16 %v60
    %v557 = vunpack.c.h.b16 %v60
    %v558 = vunpack.c.l.b16 %v61
    %v559 = vunpack.c.h.b16 %v61
    %v560 = vunpack.c.l.b16 %v62
    %v561 = vunpack.c.h.b16 %v62
    %v562 = vunpack.c.l.b16 %v63
    %v563 = vunpack.c.h.b16 %v63
    %v564 = vunpack.c.l.b16 %v64
    %v565 = vunpack.c.h.b16 %v64
    %v566 = vunpack.c.l.b16 %v65
    %v567 = vunpack.c.h.b16 %v65
    %v568 = vunpack.c.l.b16 %v66
    %v569 = vunpack.c.h.b16 %v66
    %v570 = vunpack.c.l.b16 %v67
    %v571 = vunpack.c.h.b16 %v67
    %v572 = vunpack.c.l.b16 %v68
    %v573 = vunpack.c.h.b16 %v68
    %v574 = vunpack.c.l.b16 %v69
    %v575 = vunpack.c.h.b16 %v69
    %v576 = vunpack.c.l.b16 %v70
    %v577 = vunpack.c.h.b16 %v70
    %v578 = vunpack.c.l.b16 %v71
    %v579 = vunpack.c.h.b16 %v71
    %v580 = vunpack.c.l.b16 %v72
    %v581 = vunpack.c.h.b16 %v72
    %v582 = vunpack.c.l.b16 %v73
    %v583 = vunpack.c.h.b16 %v73
    %v584 = vunpack.c.l.b16 %v74
    %v585 = vunpack.c.h.b16 %v74
    %v586 = vunpack.c.l.b16 %v75
    %v587 = vunpack.c.h.b16 %v75
    %v588 = vunpack.c.l.b16 %v76
    %v589 = vunpack.c.h.b16 %v76
    %v590 = vunpack.c.l.b16 %v77
    %v591 = vunpack.c.h.b16 %v77
    %v592 = vunpack.c.l.b16 %v78
    %v593 = vunpack.c.h.b16 %v78
    %v594 = vunpack.c.l.b16 %v79
    %v595 = vunpack.c.h.b16 %v79
    %v596 = vunpack.c.l.b16 %v80
    %v597 = vunpack.c.h.b16 %v80
    %v598 = vunpack.c.l.b16 %v81
    %v599 = vunpack.c.h.b16 %v81
    %v600 = vunpack.c.l.b16 %v82
    %v601 = vunpack.c.h.b16 %v82
    %v602 = vunpack.c.l.b16 %v83
    %v603 = vunpack.c.h.b16 %v83
    %v604 = vunpack.c.l.b16 %v84
    %v605 = vunpack.c.h.b16 %v84
    %v606 = vunpack.c.l.b16 %v85
    %v607 = vunpack.c.h.b16 %v85
    %v608 = vunpack.c.l.b16 %v86
    %v609 = vunpack.c.h.b16 %v86
    %v610 = vunpack.c.l.b16 %v87
    %v611 = vunpack.c.h.b16 %v87
    %v612 = vpack.c.b16 %v524, %v480
    %v613 = vpack.c.b16 %v525, %v481
    %v614 = vpack.c.b16 %v526, %v482
    %v615 = vpack.c.b16 %v527, %v483
    %v616 = vpack.c.b16 %v528, %v484
    %v617 = vpack.c.b16 %v529, %v485
    %v618 = vpack.c.b16 %v530, %v486
    %v619 = vpack.c.b16 %v531, %v487
    %v620 = vpack.c.b16 %v532, %v488
    %v621 = vpack.c.b16 %v533, %v489
    %v622 = vpack.c.b16 %v534, %v490
    %v623 = vpack.c.b16 %v535, %v491
    %v624 = vpack.c.b16 %v536, %v492
    %v625 = vpack.c.b16 %v537, %v493
    %v626 = vpack.c.b16 %v538, %v494
    %v627 = vpack.c.b16 %v539, %v495
    %v628 = vpack.c.b16 %v540, %v496
    %v629 = vpack.c.b16 %v541, %v497
    %v630 = vpack.c.b16 %v542, %v498
    %v631 = vpack.c.b16 %v543, %v499
    %v632 = vpack.c.b16 %v544, %v500
    %v633 = vpack.c.b16 %v545, %v501
    %v634 = vpack.c.b16 %v546, %v502
    %v635 = vpack.c.b16 %v547, %v503
    %v636 = vpack.c.b16 %v548, %v504
    %v637 = vpack.c.b16 %v549, %v505
    %v638 = vpack.c.b16 %v550, %v506
    %v639 = vpack.c.b16 %v551, %v507
    %v640 = vpack.c.b16 %v552, %v508
    %v641 = vpack.c.b16 %v553, %v509
    %v642 = vpack.c.b16 %v554, %v510
    %v643 = vpack.c.b16 %v555, %v511
    %v644 = vpack.c.b16 %v556, %v512
    %v645 = vpack.c.b16 %v557, %v513
    %v646 = vpack.c.b16 %v558, %v514
    %v647 = vpack.c.b16 %v559, %v515
    %v648 = vpack.c.b16 %v560, %v516
    %v649 = vpack.c.b16 %v561, %v517
    %v650 = vpack.c.b16 %v562, %v518
    %v651 = vpack.c.b16 %v563, %v519
    %v652 = vpack.c.b16 %v564, %v520
    %v653 = vpack.c.b16 %v565, %v521
    %v654 = vpack.c.b16 %v566, %v522
    %v655 = vpack.c.b16 %v567, %v523
    %v656 = vpack.c.b16 %v568, %v568
    %v657 = vpack.c.b16 %v569, %v569
    %v658 = vpack.c.b16 %v570, %v570
    %v659 = vpack.c.b16 %v571, %v571
    %v660 = vpack.c.b16 %v572, %v572
    %v661 = vpack.c.b16 %v573, %v573
    %v662 = vpack.c.b16 %v574, %v574
    %v663 = vpack.c.b16 %v575, %v575
    %v664 = vpack.c.b16 %v576, %v576
    %v665 = vpack.c.b16 %v577, %v577
    %v666 = vpack.c.b16 %v578, %v578
    %v667 = vpack.c.b16 %v579, %v579
    %v668 = vpack.c.b16 %v580, %v580
    %v669 = vpack.c.b16 %v581, %v581
    %v670 = vpack.c.b16 %v582, %v582
    %v671 = vpack.c.b16 %v583, %v583
    %v672 = vpack.c.b16 %v584, %v584
    %v673 = vpack.c.b16 %v585, %v585
    %v674 = vpack.c.b16 %v586, %v586
    %v675 = vpack.c.b16 %v587, %v587
    %v676 = vpack.c.b16 %v588, %v588
    %v677 = vpack.c.b16 %v589, %v589
    %v678 = vpack.c.b16 %v590, %v590
    %v679 = vpack.c.b16 %v591, %v591
    %v680 = vpack.c.b16 %v592, %v592
    %v681 = vpack.c.b16 %v593, %v593
    %v682 = vpack.c.b16 %v594, %v594
    %v683 = vpack.c.b16 %v595, %v595
    %v684 = vpack.c.b16 %v596, %v596
    %v685 = vpack.c.b16 %v597, %v597
    %v686 = vpack.c.b16 %v598, %v598
    %v687 = vpack.c.b16 %v599, %v599
    %v688 = vpack.c.b16 %v600, %v600
    %v689 = vpack.c.b16 %v601, %v601
    %v690 = vpack.c.b16 %v602, %v602
    %v691 = vpack.c.b16 %v603, %v603
    %v692 = vpack.c.b16 %v604, %v604
    %v693 = vpack.c.b16 %v605, %v605
    %v694 = vpack.c.b16 %v606, %v606
    %v695 = vpack.c.b16 %v607, %v607
    %v696 = vpack.c.b16 %v608, %v608
    %v697 = vpack.c.b16 %v609, %v609
    %v698 = vpack.c.b16 %v610, %v610
    %v699 = vpack.c.b16 %v611, %v611
    %788 = vmatprep.subr.bf16.mxu0 %v613
    %789 = vmatpush1.bf16.xpose.msra.mxu0 %v612
    %790 = vmatprep.subr.bf16.mxu0 %v657
    %791 = vmatpush1.bf16.xpose.msra.mxu0 %v656
    %792 = vmatprep.subr.bf16.mxu0 0
    %793 = vmatpush1.bf16.xpose.msra.mxu0 0
    %794 = vmatprep.subr.bf16.mxu0 0
    %795 = vmatpush1.bf16.xpose.msra.mxu0 0
    %796 = vmatprep.subr.bf16.mxu0 0
    %797 = vmatpush1.bf16.xpose.msra.mxu0 0
    %798 = vmatprep.subr.bf16.mxu0 0
    %799 = vmatpush1.bf16.xpose.msra.mxu0 0
    %800 = vmatprep.subr.bf16.mxu0 0
    %801 = vmatpush1.bf16.xpose.msra.mxu0 0
    %802 = vmatprep.subr.bf16.mxu0 0
    %803 = vmatpush1.bf16.xpose.msra.mxu0 0
    %804 = vmatprep.subr.bf16.mxu0 0
    %805 = vmatpush1.bf16.xpose.msra.mxu0 0
    %806 = vmatprep.subr.bf16.mxu0 0
    %807 = vmatpush1.bf16.xpose.msra.mxu0 0
    %808 = vmatprep.subr.bf16.mxu0 0
    %809 = vmatpush1.bf16.xpose.msra.mxu0 0
    %810 = vmatprep.subr.bf16.mxu0 0
    %811 = vmatpush1.bf16.xpose.msra.mxu0 0
    %812 = vmatprep.subr.bf16.mxu0 0
    %813 = vmatpush1.bf16.xpose.msra.mxu0 0
    %814 = vmatprep.subr.bf16.mxu0 0
    %815 = vmatpush1.bf16.xpose.msra.mxu0 0
    %816 = vmatprep.subr.bf16.mxu0 0
    %817 = vmatpush1.bf16.xpose.msra.mxu0 0
    %818 = vmatprep.subr.bf16.mxu0 0
    %819 = vmatpush1.bf16.xpose.msra.mxu0 0
    %820 = vmatprep.mubr.bf16.mxu0 %v138
    %821 = vmatmul.mubr.bf16.gmra.mrb[0].mxu0 %v124
    %v822 = vpop.f32.mrb[0].mxu0
    %v823 = vadd.f32 %v93, %v822
    %v824 = vpop.f32.mrb[0].mxu0
    %v825 = vpop.f32.mrb[0].mxu0
    %v826 = vpop.f32.mrb[0].mxu0
    %827 = vdwg.mxu0
    %828 = vmatprep.subr.bf16.mxu0 %v615
    %829 = vmatpush1.bf16.xpose.msra.mxu0 %v614
    %830 = vmatprep.subr.bf16.mxu0 %v659
    %831 = vmatpush1.bf16.xpose.msra.mxu0 %v658
    %832 = vmatprep.subr.bf16.mxu0 0
    %833 = vmatpush1.bf16.xpose.msra.mxu0 0
    %834 = vmatprep.subr.bf16.mxu0 0
    %835 = vmatpush1.bf16.xpose.msra.mxu0 0
    %836 = vmatprep.subr.bf16.mxu0 0
    %837 = vmatpush1.bf16.xpose.msra.mxu0 0
    %838 = vmatprep.subr.bf16.mxu0 0
    %839 = vmatpush1.bf16.xpose.msra.mxu0 0
    %840 = vmatprep.subr.bf16.mxu0 0
    %841 = vmatpush1.bf16.xpose.msra.mxu0 0
    %842 = vmatprep.subr.bf16.mxu0 0
    %843 = vmatpush1.bf16.xpose.msra.mxu0 0
    %844 = vmatprep.subr.bf16.mxu0 0
    %845 = vmatpush1.bf16.xpose.msra.mxu0 0
    %846 = vmatprep.subr.bf16.mxu0 0
    %847 = vmatpush1.bf16.xpose.msra.mxu0 0
    %848 = vmatprep.subr.bf16.mxu0 0
    %849 = vmatpush1.bf16.xpose.msra.mxu0 0
    %850 = vmatprep.subr.bf16.mxu0 0
    %851 = vmatpush1.bf16.xpose.msra.mxu0 0
    %852 = vmatprep.subr.bf16.mxu0 0
    %853 = vmatpush1.bf16.xpose.msra.mxu0 0
    %854 = vmatprep.subr.bf16.mxu0 0
    %855 = vmatpush1.bf16.xpose.msra.mxu0 0
    %856 = vmatprep.subr.bf16.mxu0 0
    %857 = vmatpush1.bf16.xpose.msra.mxu0 0
    %858 = vmatprep.subr.bf16.mxu0 0
    %859 = vmatpush1.bf16.xpose.msra.mxu0 0
    %860 = vmatprep.mubr.bf16.mxu0 %v148
    %861 = vmatmul.mubr.bf16.gmra.mrb[0].mxu0 %v146
    %v862 = vpop.f32.mrb[0].mxu0
    %v863 = vadd.f32 %v823, %v862
    %v864 = vpop.f32.mrb[0].mxu0
    %v865 = vpop.f32.mrb[0].mxu0
    %v866 = vpop.f32.mrb[0].mxu0
    %867 = vdwg.mxu0
    %868 = vmatprep.subr.bf16.mxu0 %v617
    %869 = vmatpush1.bf16.xpose.msra.mxu0 %v616
    %870 = vmatprep.subr.bf16.mxu0 %v661
    %871 = vmatpush1.bf16.xpose.msra.mxu0 %v660
    %872 = vmatprep.subr.bf16.mxu0 0
    %873 = vmatpush1.bf16.xpose.msra.mxu0 0
    %874 = vmatprep.subr.bf16.mxu0 0
    %875 = vmatpush1.bf16.xpose.msra.mxu0 0
    %876 = vmatprep.subr.bf16.mxu0 0
    %877 = vmatpush1.bf16.xpose.msra.mxu0 0
    %878 = vmatprep.subr.bf16.mxu0 0
    %879 = vmatpush1.bf16.xpose.msra.mxu0 0
    %880 = vmatprep.subr.bf16.mxu0 0
    %881 = vmatpush1.bf16.xpose.msra.mxu0 0
    %882 = vmatprep.subr.bf16.mxu0 0
    %883 = vmatpush1.bf16.xpose.msra.mxu0 0
    %884 = vmatprep.subr.bf16.mxu0 0
    %885 = vmatpush1.bf16.xpose.msra.mxu0 0
    %886 = vmatprep.subr.bf16.mxu0 0
    %887 = vmatpush1.bf16.xpose.msra.mxu0 0
    %888 = vmatprep.subr.bf16.mxu0 0
    %889 = vmatpush1.bf16.xpose.msra.mxu0 0
    %890 = vmatprep.subr.bf16.mxu0 0
    %891 = vmatpush1.bf16.xpose.msra.mxu0 0
    %892 = vmatprep.subr.bf16.mxu0 0
    %893 = vmatpush1.bf16.xpose.msra.mxu0 0
    %894 = vmatprep.subr.bf16.mxu0 0
    %895 = vmatpush1.bf16.xpose.msra.mxu0 0
    %896 = vmatprep.subr.bf16.mxu0 0
    %897 = vmatpush1.bf16.xpose.msra.mxu0 0
    %898 = vmatprep.subr.bf16.mxu0 0
    %899 = vmatpush1.bf16.xpose.msra.mxu0 0
    %900 = vmatprep.mubr.bf16.mxu0 %v145
    %901 = vmatmul.mubr.bf16.gmra.mrb[0].mxu0 %v131
    %v902 = vpop.f32.mrb[0].mxu0
    %v903 = vadd.f32 %v863, %v902
    %v904 = vpop.f32.mrb[0].mxu0
    %v905 = vpop.f32.mrb[0].mxu0
    %v906 = vpop.f32.mrb[0].mxu0
    %907 = vdwg.mxu0
    %908 = vmatprep.subr.bf16.mxu0 %v619
    %909 = vmatpush1.bf16.xpose.msra.mxu0 %v618
    %910 = vmatprep.subr.bf16.mxu0 %v663
    %911 = vmatpush1.bf16.xpose.msra.mxu0 %v662
    %912 = vmatprep.subr.bf16.mxu0 0
    %913 = vmatpush1.bf16.xpose.msra.mxu0 0
    %914 = vmatprep.subr.bf16.mxu0 0
    %915 = vmatpush1.bf16.xpose.msra.mxu0 0
    %916 = vmatprep.subr.bf16.mxu0 0
    %917 = vmatpush1.bf16.xpose.msra.mxu0 0
    %918 = vmatprep.subr.bf16.mxu0 0
    %919 = vmatpush1.bf16.xpose.msra.mxu0 0
    %920 = vmatprep.subr.bf16.mxu0 0
    %921 = vmatpush1.bf16.xpose.msra.mxu0 0
    %922 = vmatprep.subr.bf16.mxu0 0
    %923 = vmatpush1.bf16.xpose.msra.mxu0 0
    %924 = vmatprep.subr.bf16.mxu0 0
    %925 = vmatpush1.bf16.xpose.msra.mxu0 0
    %926 = vmatprep.subr.bf16.mxu0 0
    %927 = vmatpush1.bf16.xpose.msra.mxu0 0
    %928 = vmatprep.subr.bf16.mxu0 0
    %929 = vmatpush1.bf16.xpose.msra.mxu0 0
    %930 = vmatprep.subr.bf16.mxu0 0
    %931 = vmatpush1.bf16.xpose.msra.mxu0 0
    %932 = vmatprep.subr.bf16.mxu0 0
    %933 = vmatpush1.bf16.xpose.msra.mxu0 0
    %934 = vmatprep.subr.bf16.mxu0 0
    %935 = vmatpush1.bf16.xpose.msra.mxu0 0
    %936 = vmatprep.subr.bf16.mxu0 0
    %937 = vmatpush1.bf16.xpose.msra.mxu0 0
    %938 = vmatprep.subr.bf16.mxu0 0
    %939 = vmatpush1.bf16.xpose.msra.mxu0 0
    %940 = vmatprep.mubr.bf16.mxu0 %v149
    %941 = vmatmul.mubr.bf16.gmra.mrb[0].mxu0 %v147
    %v942 = vpop.f32.mrb[0].mxu0
    %v943 = vadd.f32 %v903, %v942
    %v944 = vpop.f32.mrb[0].mxu0
    %v945 = vpop.f32.mrb[0].mxu0
    %v946 = vpop.f32.mrb[0].mxu0
    %947 = vdwg.mxu0
    %948 = vmatprep.subr.bf16.mxu0 %v621
    %949 = vmatpush1.bf16.xpose.msra.mxu0 %v620
    %950 = vmatprep.subr.bf16.mxu0 %v665
    %951 = vmatpush1.bf16.xpose.msra.mxu0 %v664
    %952 = vmatprep.subr.bf16.mxu0 0
    %953 = vmatpush1.bf16.xpose.msra.mxu0 0
    %954 = vmatprep.subr.bf16.mxu0 0
    %955 = vmatpush1.bf16.xpose.msra.mxu0 0
    %956 = vmatprep.subr.bf16.mxu0 0
    %957 = vmatpush1.bf16.xpose.msra.mxu0 0
    %958 = vmatprep.subr.bf16.mxu0 0
    %959 = vmatpush1.bf16.xpose.msra.mxu0 0
    %960 = vmatprep.subr.bf16.mxu0 0
    %961 = vmatpush1.bf16.xpose.msra.mxu0 0
    %962 = vmatprep.subr.bf16.mxu0 0
    %963 = vmatpush1.bf16.xpose.msra.mxu0 0
    %964 = vmatprep.subr.bf16.mxu0 0
    %965 = vmatpush1.bf16.xpose.msra.mxu0 0
    %966 = vmatprep.subr.bf16.mxu0 0
    %967 = vmatpush1.bf16.xpose.msra.mxu0 0
    %968 = vmatprep.subr.bf16.mxu0 0
    %969 = vmatpush1.bf16.xpose.msra.mxu0 0
    %970 = vmatprep.subr.bf16.mxu0 0
    %971 = vmatpush1.bf16.xpose.msra.mxu0 0
    %972 = vmatprep.subr.bf16.mxu0 0
    %973 = vmatpush1.bf16.xpose.msra.mxu0 0
    %974 = vmatprep.subr.bf16.mxu0 0
    %975 = vmatpush1.bf16.xpose.msra.mxu0 0
    %976 = vmatprep.subr.bf16.mxu0 0
    %977 = vmatpush1.bf16.xpose.msra.mxu0 0
    %978 = vmatprep.subr.bf16.mxu0 0
    %979 = vmatpush1.bf16.xpose.msra.mxu0 0
    %980 = vmatprep.mubr.bf16.mxu0 %v187
    %981 = vmatmul.mubr.bf16.gmra.mrb[0].mxu0 %v173
    %v982 = vpop.f32.mrb[0].mxu0
    %v983 = vadd.f32 %v943, %v982
    %v984 = vpop.f32.mrb[0].mxu0
    %v985 = vpop.f32.mrb[0].mxu0
    %v986 = vpop.f32.mrb[0].mxu0
    %987 = vdwg.mxu0
    %988 = vmatprep.subr.bf16.mxu0 %v623
    %989 = vmatpush1.bf16.xpose.msra.mxu0 %v622
    %990 = vmatprep.subr.bf16.mxu0 %v667
    %991 = vmatpush1.bf16.xpose.msra.mxu0 %v666
    %992 = vmatprep.subr.bf16.mxu0 0
    %993 = vmatpush1.bf16.xpose.msra.mxu0 0
    %994 = vmatprep.subr.bf16.mxu0 0
    %995 = vmatpush1.bf16.xpose.msra.mxu0 0
    %996 = vmatprep.subr.bf16.mxu0 0
    %997 = vmatpush1.bf16.xpose.msra.mxu0 0
    %998 = vmatprep.subr.bf16.mxu0 0
    %999 = vmatpush1.bf16.xpose.msra.mxu0 0
    %1000 = vmatprep.subr.bf16.mxu0 0
    %1001 = vmatpush1.bf16.xpose.msra.mxu0 0
    %1002 = vmatprep.subr.bf16.mxu0 0
    %1003 = vmatpush1.bf16.xpose.msra.mxu0 0
    %1004 = vmatprep.subr.bf16.mxu0 0
    %1005 = vmatpush1.bf16.xpose.msra.mxu0 0
    %1006 = vmatprep.subr.bf16.mxu0 0
    %1007 = vmatpush1.bf16.xpose.msra.mxu0 0
    %1008 = vmatprep.subr.bf16.mxu0 0
    %1009 = vmatpush1.bf16.xpose.msra.mxu0 0
    %1010 = vmatprep.subr.bf16.mxu0 0
    %1011 = vmatpush1.bf16.xpose.msra.mxu0 0
    %1012 = vmatprep.subr.bf16.mxu0 0
    %1013 = vmatpush1.bf16.xpose.msra.mxu0 0
    %1014 = vmatprep.subr.bf16.mxu0 0
    %1015 = vmatpush1.bf16.xpose.msra.mxu0 0
    %1016 = vmatprep.subr.bf16.mxu0 0
    %1017 = vmatpush1.bf16.xpose.msra.mxu0 0
    %1018 = vmatprep.subr.bf16.mxu0 0
    %1019 = vmatpush1.bf16.xpose.msra.mxu0 0
    %1020 = vmatprep.mubr.bf16.mxu0 %v197
    %1021 = vmatmul.mubr.bf16.gmra.mrb[0].mxu0 %v195
    %v1022 = vpop.f32.mrb[0].mxu0
    %v1023 = vadd.f32 %v983, %v1022
    %v1024 = vpop.f32.mrb[0].mxu0
    %v1025 = vpop.f32.mrb[0].mxu0
    %v1026 = vpop.f32.mrb[0].mxu0
    %1027 = vdwg.mxu0
    %1028 = vmatprep.subr.bf16.mxu0 %v625
    %1029 = vmatpush1.bf16.xpose.msra.mxu0 %v624
    %1030 = vmatprep.subr.bf16.mxu0 %v669
    %1031 = vmatpush1.bf16.xpose.msra.mxu0 %v668
    %1032 = vmatprep.subr.bf16.mxu0 0
    %1033 = vmatpush1.bf16.xpose.msra.mxu0 0
    %1034 = vmatprep.subr.bf16.mxu0 0
    %1035 = vmatpush1.bf16.xpose.msra.mxu0 0
    %1036 = vmatprep.subr.bf16.mxu0 0
    %1037 = vmatpush1.bf16.xpose.msra.mxu0 0
    %1038 = vmatprep.subr.bf16.mxu0 0
    %1039 = vmatpush1.bf16.xpose.msra.mxu0 0
    %1040 = vmatprep.subr.bf16.mxu0 0
    %1041 = vmatpush1.bf16.xpose.msra.mxu0 0
    %1042 = vmatprep.subr.bf16.mxu0 0
    %1043 = vmatpush1.bf16.xpose.msra.mxu0 0
    %1044 = vmatprep.subr.bf16.mxu0 0
    %1045 = vmatpush1.bf16.xpose.msra.mxu0 0
    %1046 = vmatprep.subr.bf16.mxu0 0
    %1047 = vmatpush1.bf16.xpose.msra.mxu0 0
    %1048 = vmatprep.subr.bf16.mxu0 0
    %1049 = vmatpush1.bf16.xpose.msra.mxu0 0
    %1050 = vmatprep.subr.bf16.mxu0 0
    %1051 = vmatpush1.bf16.xpose.msra.mxu0 0
    %1052 = vmatprep.subr.bf16.mxu0 0
    %1053 = vmatpush1.bf16.xpose.msra.mxu0 0
    %1054 = vmatprep.subr.bf16.mxu0 0
    %1055 = vmatpush1.bf16.xpose.msra.mxu0 0
    %1056 = vmatprep.subr.bf16.mxu0 0
    %1057 = vmatpush1.bf16.xpose.msra.mxu0 0
    %1058 = vmatprep.subr.bf16.mxu0 0
    %1059 = vmatpush1.bf16.xpose.msra.mxu0 0
    %1060 = vmatprep.mubr.bf16.mxu0 %v194
    %1061 = vmatmul.mubr.bf16.gmra.mrb[0].mxu0 %v180
    %v1062 = vpop.f32.mrb[0].mxu0
    %v1063 = vadd.f32 %v1023, %v1062
    %v1064 = vpop.f32.mrb[0].mxu0
    %v1065 = vpop.f32.mrb[0].mxu0
    %v1066 = vpop.f32.mrb[0].mxu0
    %1067 = vdwg.mxu0
    %1068 = vmatprep.subr.bf16.mxu0 %v627
    %1069 = vmatpush1.bf16.xpose.msra.mxu0 %v626
    %1070 = vmatprep.subr.bf16.mxu0 %v671
    %1071 = vmatpush1.bf16.xpose.msra.mxu0 %v670
    %1072 = vmatprep.subr.bf16.mxu0 0
    %1073 = vmatpush1.bf16.xpose.msra.mxu0 0
    %1074 = vmatprep.subr.bf16.mxu0 0
    %1075 = vmatpush1.bf16.xpose.msra.mxu0 0
    %1076 = vmatprep.subr.bf16.mxu0 0
    %1077 = vmatpush1.bf16.xpose.msra.mxu0 0
    %1078 = vmatprep.subr.bf16.mxu0 0
    %1079 = vmatpush1.bf16.xpose.msra.mxu0 0
    %1080 = vmatprep.subr.bf16.mxu0 0
    %1081 = vmatpush1.bf16.xpose.msra.mxu0 0
    %1082 = vmatprep.subr.bf16.mxu0 0
    %1083 = vmatpush1.bf16.xpose.msra.mxu0 0
    %1084 = vmatprep.subr.bf16.mxu0 0
    %1085 = vmatpush1.bf16.xpose.msra.mxu0 0
    %1086 = vmatprep.subr.bf16.mxu0 0
    %1087 = vmatpush1.bf16.xpose.msra.mxu0 0
    %1088 = vmatprep.subr.bf16.mxu0 0
    %1089 = vmatpush1.bf16.xpose.msra.mxu0 0
    %1090 = vmatprep.subr.bf16.mxu0 0
    %1091 = vmatpush1.bf16.xpose.msra.mxu0 0
    %1092 = vmatprep.subr.bf16.mxu0 0
    %1093 = vmatpush1.bf16.xpose.msra.mxu0 0
    %1094 = vmatprep.subr.bf16.mxu0 0
    %1095 = vmatpush1.bf16.xpose.msra.mxu0 0
    %1096 = vmatprep.subr.bf16.mxu0 0
    %1097 = vmatpush1.bf16.xpose.msra.mxu0 0
    %1098 = vmatprep.subr.bf16.mxu0 0
    %1099 = vmatpush1.bf16.xpose.msra.mxu0 0
    %1100 = vmatprep.mubr.bf16.mxu0 %v198
    %1101 = vmatmul.mubr.bf16.gmra.mrb[0].mxu0 %v196
    %v1102 = vpop.f32.mrb[0].mxu0
    %v1103 = vadd.f32 %v1063, %v1102
    %v1104 = vpop.f32.mrb[0].mxu0
    %v1105 = vpop.f32.mrb[0].mxu0
    %v1106 = vpop.f32.mrb[0].mxu0
    %1107 = vdwg.mxu0
    %1108 = vmatprep.subr.bf16.mxu0 %v629
    %1109 = vmatpush1.bf16.xpose.msra.mxu0 %v628
    %1110 = vmatprep.subr.bf16.mxu0 %v673
    %1111 = vmatpush1.bf16.xpose.msra.mxu0 %v672
    %1112 = vmatprep.subr.bf16.mxu0 0
    %1113 = vmatpush1.bf16.xpose.msra.mxu0 0
    %1114 = vmatprep.subr.bf16.mxu0 0
    %1115 = vmatpush1.bf16.xpose.msra.mxu0 0
    %1116 = vmatprep.subr.bf16.mxu0 0
    %1117 = vmatpush1.bf16.xpose.msra.mxu0 0
    %1118 = vmatprep.subr.bf16.mxu0 0
    %1119 = vmatpush1.bf16.xpose.msra.mxu0 0
    %1120 = vmatprep.subr.bf16.mxu0 0
    %1121 = vmatpush1.bf16.xpose.msra.mxu0 0
    %1122 = vmatprep.subr.bf16.mxu0 0
    %1123 = vmatpush1.bf16.xpose.msra.mxu0 0
    %1124 = vmatprep.subr.bf16.mxu0 0
    %1125 = vmatpush1.bf16.xpose.msra.mxu0 0
    %1126 = vmatprep.subr.bf16.mxu0 0
    %1127 = vmatpush1.bf16.xpose.msra.mxu0 0
    %1128 = vmatprep.subr.bf16.mxu0 0
    %1129 = vmatpush1.bf16.xpose.msra.mxu0 0
    %1130 = vmatprep.subr.bf16.mxu0 0
    %1131 = vmatpush1.bf16.xpose.msra.mxu0 0
    %1132 = vmatprep.subr.bf16.mxu0 0
    %1133 = vmatpush1.bf16.xpose.msra.mxu0 0
    %1134 = vmatprep.subr.bf16.mxu0 0
    %1135 = vmatpush1.bf16.xpose.msra.mxu0 0
    %1136 = vmatprep.subr.bf16.mxu0 0
    %1137 = vmatpush1.bf16.xpose.msra.mxu0 0
    %1138 = vmatprep.subr.bf16.mxu0 0
    %1139 = vmatpush1.bf16.xpose.msra.mxu0 0
    %1140 = vmatprep.mubr.bf16.mxu0 %v236
    %1141 = vmatmul.mubr.bf16.gmra.mrb[0].mxu0 %v222
    %v1142 = vpop.f32.mrb[0].mxu0
    %v1143 = vadd.f32 %v1103, %v1142
    %v1144 = vpop.f32.mrb[0].mxu0
    %v1145 = vpop.f32.mrb[0].mxu0
    %v1146 = vpop.f32.mrb[0].mxu0
    %1147 = vdwg.mxu0
    %1148 = vmatprep.subr.bf16.mxu0 %v631
    %1149 = vmatpush1.bf16.xpose.msra.mxu0 %v630
    %1150 = vmatprep.subr.bf16.mxu0 %v675
    %1151 = vmatpush1.bf16.xpose.msra.mxu0 %v674
    %1152 = vmatprep.subr.bf16.mxu0 0
    %1153 = vmatpush1.bf16.xpose.msra.mxu0 0
    %1154 = vmatprep.subr.bf16.mxu0 0
    %1155 = vmatpush1.bf16.xpose.msra.mxu0 0
    %1156 = vmatprep.subr.bf16.mxu0 0
    %1157 = vmatpush1.bf16.xpose.msra.mxu0 0
    %1158 = vmatprep.subr.bf16.mxu0 0
    %1159 = vmatpush1.bf16.xpose.msra.mxu0 0
    %1160 = vmatprep.subr.bf16.mxu0 0
    %1161 = vmatpush1.bf16.xpose.msra.mxu0 0
    %1162 = vmatprep.subr.bf16.mxu0 0
    %1163 = vmatpush1.bf16.xpose.msra.mxu0 0
    %1164 = vmatprep.subr.bf16.mxu0 0
    %1165 = vmatpush1.bf16.xpose.msra.mxu0 0
    %1166 = vmatprep.subr.bf16.mxu0 0
    %1167 = vmatpush1.bf16.xpose.msra.mxu0 0
    %1168 = vmatprep.subr.bf16.mxu0 0
    %1169 = vmatpush1.bf16.xpose.msra.mxu0 0
    %1170 = vmatprep.subr.bf16.mxu0 0
    %1171 = vmatpush1.bf16.xpose.msra.mxu0 0
    %1172 = vmatprep.subr.bf16.mxu0 0
    %1173 = vmatpush1.bf16.xpose.msra.mxu0 0
    %1174 = vmatprep.subr.bf16.mxu0 0
    %1175 = vmatpush1.bf16.xpose.msra.mxu0 0
    %1176 = vmatprep.subr.bf16.mxu0 0
    %1177 = vmatpush1.bf16.xpose.msra.mxu0 0
    %1178 = vmatprep.subr.bf16.mxu0 0
    %1179 = vmatpush1.bf16.xpose.msra.mxu0 0
    %1180 = vmatprep.mubr.bf16.mxu0 %v246
    %1181 = vmatmul.mubr.bf16.gmra.mrb[0].mxu0 %v244
    %v1182 = vpop.f32.mrb[0].mxu0
    %v1183 = vadd.f32 %v1143, %v1182
    %v1184 = vpop.f32.mrb[0].mxu0
    %v1185 = vpop.f32.mrb[0].mxu0
    %v1186 = vpop.f32.mrb[0].mxu0
    %1187 = vdwg.mxu0
    %1188 = vmatprep.subr.bf16.mxu0 %v633
    %1189 = vmatpush1.bf16.xpose.msra.mxu0 %v632
    %1190 = vmatprep.subr.bf16.mxu0 %v677
    %1191 = vmatpush1.bf16.xpose.msra.mxu0 %v676
    %1192 = vmatprep.subr.bf16.mxu0 0
    %1193 = vmatpush1.bf16.xpose.msra.mxu0 0
    %1194 = vmatprep.subr.bf16.mxu0 0
    %1195 = vmatpush1.bf16.xpose.msra.mxu0 0
    %1196 = vmatprep.subr.bf16.mxu0 0
    %1197 = vmatpush1.bf16.xpose.msra.mxu0 0
    %1198 = vmatprep.subr.bf16.mxu0 0
    %1199 = vmatpush1.bf16.xpose.msra.mxu0 0
    %1200 = vmatprep.subr.bf16.mxu0 0
    %1201 = vmatpush1.bf16.xpose.msra.mxu0 0
    %1202 = vmatprep.subr.bf16.mxu0 0
    %1203 = vmatpush1.bf16.xpose.msra.mxu0 0
    %1204 = vmatprep.subr.bf16.mxu0 0
    %1205 = vmatpush1.bf16.xpose.msra.mxu0 0
    %1206 = vmatprep.subr.bf16.mxu0 0
    %1207 = vmatpush1.bf16.xpose.msra.mxu0 0
    %1208 = vmatprep.subr.bf16.mxu0 0
    %1209 = vmatpush1.bf16.xpose.msra.mxu0 0
    %1210 = vmatprep.subr.bf16.mxu0 0
    %1211 = vmatpush1.bf16.xpose.msra.mxu0 0
    %1212 = vmatprep.subr.bf16.mxu0 0
    %1213 = vmatpush1.bf16.xpose.msra.mxu0 0
    %1214 = vmatprep.subr.bf16.mxu0 0
    %1215 = vmatpush1.bf16.xpose.msra.mxu0 0
    %1216 = vmatprep.subr.bf16.mxu0 0
    %1217 = vmatpush1.bf16.xpose.msra.mxu0 0
    %1218 = vmatprep.subr.bf16.mxu0 0
    %1219 = vmatpush1.bf16.xpose.msra.mxu0 0
    %1220 = vmatprep.mubr.bf16.mxu0 %v243
    %1221 = vmatmul.mubr.bf16.gmra.mrb[0].mxu0 %v229
    %v1222 = vpop.f32.mrb[0].mxu0
    %v1223 = vadd.f32 %v1183, %v1222
    %v1224 = vpop.f32.mrb[0].mxu0
    %v1225 = vpop.f32.mrb[0].mxu0
    %v1226 = vpop.f32.mrb[0].mxu0
    %1227 = vdwg.mxu0
    %1228 = vmatprep.subr.bf16.mxu0 %v635
    %1229 = vmatpush1.bf16.xpose.msra.mxu0 %v634
    %1230 = vmatprep.subr.bf16.mxu0 %v679
    %1231 = vmatpush1.bf16.xpose.msra.mxu0 %v678
    %1232 = vmatprep.subr.bf16.mxu0 0
    %1233 = vmatpush1.bf16.xpose.msra.mxu0 0
    %1234 = vmatprep.subr.bf16.mxu0 0
    %1235 = vmatpush1.bf16.xpose.msra.mxu0 0
    %1236 = vmatprep.subr.bf16.mxu0 0
    %1237 = vmatpush1.bf16.xpose.msra.mxu0 0
    %1238 = vmatprep.subr.bf16.mxu0 0
    %1239 = vmatpush1.bf16.xpose.msra.mxu0 0
    %1240 = vmatprep.subr.bf16.mxu0 0
    %1241 = vmatpush1.bf16.xpose.msra.mxu0 0
    %1242 = vmatprep.subr.bf16.mxu0 0
    %1243 = vmatpush1.bf16.xpose.msra.mxu0 0
    %1244 = vmatprep.subr.bf16.mxu0 0
    %1245 = vmatpush1.bf16.xpose.msra.mxu0 0
    %1246 = vmatprep.subr.bf16.mxu0 0
    %1247 = vmatpush1.bf16.xpose.msra.mxu0 0
    %1248 = vmatprep.subr.bf16.mxu0 0
    %1249 = vmatpush1.bf16.xpose.msra.mxu0 0
    %1250 = vmatprep.subr.bf16.mxu0 0
    %1251 = vmatpush1.bf16.xpose.msra.mxu0 0
    %1252 = vmatprep.subr.bf16.mxu0 0
    %1253 = vmatpush1.bf16.xpose.msra.mxu0 0
    %1254 = vmatprep.subr.bf16.mxu0 0
    %1255 = vmatpush1.bf16.xpose.msra.mxu0 0
    %1256 = vmatprep.subr.bf16.mxu0 0
    %1257 = vmatpush1.bf16.xpose.msra.mxu0 0
    %1258 = vmatprep.subr.bf16.mxu0 0
    %1259 = vmatpush1.bf16.xpose.msra.mxu0 0
    %1260 = vmatprep.mubr.bf16.mxu0 %v247
    %1261 = vmatmul.mubr.bf16.gmra.mrb[0].mxu0 %v245
    %v1262 = vpop.f32.mrb[0].mxu0
    %v1263 = vadd.f32 %v1223, %v1262
    %v1264 = vpop.f32.mrb[0].mxu0
    %v1265 = vpop.f32.mrb[0].mxu0
    %v1266 = vpop.f32.mrb[0].mxu0
    %1267 = vdwg.mxu0
    %1268 = vmatprep.subr.bf16.mxu0 %v637
    %1269 = vmatpush1.bf16.xpose.msra.mxu0 %v636
    %1270 = vmatprep.subr.bf16.mxu0 %v681
    %1271 = vmatpush1.bf16.xpose.msra.mxu0 %v680
    %1272 = vmatprep.subr.bf16.mxu0 0
    %1273 = vmatpush1.bf16.xpose.msra.mxu0 0
    %1274 = vmatprep.subr.bf16.mxu0 0
    %1275 = vmatpush1.bf16.xpose.msra.mxu0 0
    %1276 = vmatprep.subr.bf16.mxu0 0
    %1277 = vmatpush1.bf16.xpose.msra.mxu0 0
    %1278 = vmatprep.subr.bf16.mxu0 0
    %1279 = vmatpush1.bf16.xpose.msra.mxu0 0
    %1280 = vmatprep.subr.bf16.mxu0 0
    %1281 = vmatpush1.bf16.xpose.msra.mxu0 0
    %1282 = vmatprep.subr.bf16.mxu0 0
    %1283 = vmatpush1.bf16.xpose.msra.mxu0 0
    %1284 = vmatprep.subr.bf16.mxu0 0
    %1285 = vmatpush1.bf16.xpose.msra.mxu0 0
    %1286 = vmatprep.subr.bf16.mxu0 0
    %1287 = vmatpush1.bf16.xpose.msra.mxu0 0
    %1288 = vmatprep.subr.bf16.mxu0 0
    %1289 = vmatpush1.bf16.xpose.msra.mxu0 0
    %1290 = vmatprep.subr.bf16.mxu0 0
    %1291 = vmatpush1.bf16.xpose.msra.mxu0 0
    %1292 = vmatprep.subr.bf16.mxu0 0
    %1293 = vmatpush1.bf16.xpose.msra.mxu0 0
    %1294 = vmatprep.subr.bf16.mxu0 0
    %1295 = vmatpush1.bf16.xpose.msra.mxu0 0
    %1296 = vmatprep.subr.bf16.mxu0 0
    %1297 = vmatpush1.bf16.xpose.msra.mxu0 0
    %1298 = vmatprep.subr.bf16.mxu0 0
    %1299 = vmatpush1.bf16.xpose.msra.mxu0 0
    %1300 = vmatprep.mubr.bf16.mxu0 %v285
    %1301 = vmatmul.mubr.bf16.gmra.mrb[0].mxu0 %v271
    %v1302 = vpop.f32.mrb[0].mxu0
    %v1303 = vadd.f32 %v1263, %v1302
    %v1304 = vpop.f32.mrb[0].mxu0
    %v1305 = vpop.f32.mrb[0].mxu0
    %v1306 = vpop.f32.mrb[0].mxu0
    %1307 = vdwg.mxu0
    %1308 = vmatprep.subr.bf16.mxu0 %v639
    %1309 = vmatpush1.bf16.xpose.msra.mxu0 %v638
    %1310 = vmatprep.subr.bf16.mxu0 %v683
    %1311 = vmatpush1.bf16.xpose.msra.mxu0 %v682
    %1312 = vmatprep.subr.bf16.mxu0 0
    %1313 = vmatpush1.bf16.xpose.msra.mxu0 0
    %1314 = vmatprep.subr.bf16.mxu0 0
    %1315 = vmatpush1.bf16.xpose.msra.mxu0 0
    %1316 = vmatprep.subr.bf16.mxu0 0
    %1317 = vmatpush1.bf16.xpose.msra.mxu0 0
    %1318 = vmatprep.subr.bf16.mxu0 0
    %1319 = vmatpush1.bf16.xpose.msra.mxu0 0
    %1320 = vmatprep.subr.bf16.mxu0 0
    %1321 = vmatpush1.bf16.xpose.msra.mxu0 0
    %1322 = vmatprep.subr.bf16.mxu0 0
    %1323 = vmatpush1.bf16.xpose.msra.mxu0 0
    %1324 = vmatprep.subr.bf16.mxu0 0
    %1325 = vmatpush1.bf16.xpose.msra.mxu0 0
    %1326 = vmatprep.subr.bf16.mxu0 0
    %1327 = vmatpush1.bf16.xpose.msra.mxu0 0
    %1328 = vmatprep.subr.bf16.mxu0 0
    %1329 = vmatpush1.bf16.xpose.msra.mxu0 0
    %1330 = vmatprep.subr.bf16.mxu0 0
    %1331 = vmatpush1.bf16.xpose.msra.mxu0 0
    %1332 = vmatprep.subr.bf16.mxu0 0
    %1333 = vmatpush1.bf16.xpose.msra.mxu0 0
    %1334 = vmatprep.subr.bf16.mxu0 0
    %1335 = vmatpush1.bf16.xpose.msra.mxu0 0
    %1336 = vmatprep.subr.bf16.mxu0 0
    %1337 = vmatpush1.bf16.xpose.msra.mxu0 0
    %1338 = vmatprep.subr.bf16.mxu0 0
    %1339 = vmatpush1.bf16.xpose.msra.mxu0 0
    %1340 = vmatprep.mubr.bf16.mxu0 %v295
    %1341 = vmatmul.mubr.bf16.gmra.mrb[0].mxu0 %v293
    %v1342 = vpop.f32.mrb[0].mxu0
    %v1343 = vadd.f32 %v1303, %v1342
    %v1344 = vpop.f32.mrb[0].mxu0
    %v1345 = vpop.f32.mrb[0].mxu0
    %v1346 = vpop.f32.mrb[0].mxu0
    %1347 = vdwg.mxu0
    %1348 = vmatprep.subr.bf16.mxu0 %v641
    %1349 = vmatpush1.bf16.xpose.msra.mxu0 %v640
    %1350 = vmatprep.subr.bf16.mxu0 %v685
    %1351 = vmatpush1.bf16.xpose.msra.mxu0 %v684
    %1352 = vmatprep.subr.bf16.mxu0 0
    %1353 = vmatpush1.bf16.xpose.msra.mxu0 0
    %1354 = vmatprep.subr.bf16.mxu0 0
    %1355 = vmatpush1.bf16.xpose.msra.mxu0 0
    %1356 = vmatprep.subr.bf16.mxu0 0
    %1357 = vmatpush1.bf16.xpose.msra.mxu0 0
    %1358 = vmatprep.subr.bf16.mxu0 0
    %1359 = vmatpush1.bf16.xpose.msra.mxu0 0
    %1360 = vmatprep.subr.bf16.mxu0 0
    %1361 = vmatpush1.bf16.xpose.msra.mxu0 0
    %1362 = vmatprep.subr.bf16.mxu0 0
    %1363 = vmatpush1.bf16.xpose.msra.mxu0 0
    %1364 = vmatprep.subr.bf16.mxu0 0
    %1365 = vmatpush1.bf16.xpose.msra.mxu0 0
    %1366 = vmatprep.subr.bf16.mxu0 0
    %1367 = vmatpush1.bf16.xpose.msra.mxu0 0
    %1368 = vmatprep.subr.bf16.mxu0 0
    %1369 = vmatpush1.bf16.xpose.msra.mxu0 0
    %1370 = vmatprep.subr.bf16.mxu0 0
    %1371 = vmatpush1.bf16.xpose.msra.mxu0 0
    %1372 = vmatprep.subr.bf16.mxu0 0
    %1373 = vmatpush1.bf16.xpose.msra.mxu0 0
    %1374 = vmatprep.subr.bf16.mxu0 0
    %1375 = vmatpush1.bf16.xpose.msra.mxu0 0
    %1376 = vmatprep.subr.bf16.mxu0 0
    %1377 = vmatpush1.bf16.xpose.msra.mxu0 0
    %1378 = vmatprep.subr.bf16.mxu0 0
    %1379 = vmatpush1.bf16.xpose.msra.mxu0 0
    %1380 = vmatprep.mubr.bf16.mxu0 %v292
    %1381 = vmatmul.mubr.bf16.gmra.mrb[0].mxu0 %v278
    %v1382 = vpop.f32.mrb[0].mxu0
    %v1383 = vadd.f32 %v1343, %v1382
    %v1384 = vpop.f32.mrb[0].mxu0
    %v1385 = vpop.f32.mrb[0].mxu0
    %v1386 = vpop.f32.mrb[0].mxu0
    %1387 = vdwg.mxu0
    %1388 = vmatprep.subr.bf16.mxu0 %v643
    %1389 = vmatpush1.bf16.xpose.msra.mxu0 %v642
    %1390 = vmatprep.subr.bf16.mxu0 %v687
    %1391 = vmatpush1.bf16.xpose.msra.mxu0 %v686
    %1392 = vmatprep.subr.bf16.mxu0 0
    %1393 = vmatpush1.bf16.xpose.msra.mxu0 0
    %1394 = vmatprep.subr.bf16.mxu0 0
    %1395 = vmatpush1.bf16.xpose.msra.mxu0 0
    %1396 = vmatprep.subr.bf16.mxu0 0
    %1397 = vmatpush1.bf16.xpose.msra.mxu0 0
    %1398 = vmatprep.subr.bf16.mxu0 0
    %1399 = vmatpush1.bf16.xpose.msra.mxu0 0
    %1400 = vmatprep.subr.bf16.mxu0 0
    %1401 = vmatpush1.bf16.xpose.msra.mxu0 0
    %1402 = vmatprep.subr.bf16.mxu0 0
    %1403 = vmatpush1.bf16.xpose.msra.mxu0 0
    %1404 = vmatprep.subr.bf16.mxu0 0
    %1405 = vmatpush1.bf16.xpose.msra.mxu0 0
    %1406 = vmatprep.subr.bf16.mxu0 0
    %1407 = vmatpush1.bf16.xpose.msra.mxu0 0
    %1408 = vmatprep.subr.bf16.mxu0 0
    %1409 = vmatpush1.bf16.xpose.msra.mxu0 0
    %1410 = vmatprep.subr.bf16.mxu0 0
    %1411 = vmatpush1.bf16.xpose.msra.mxu0 0
    %1412 = vmatprep.subr.bf16.mxu0 0
    %1413 = vmatpush1.bf16.xpose.msra.mxu0 0
    %1414 = vmatprep.subr.bf16.mxu0 0
    %1415 = vmatpush1.bf16.xpose.msra.mxu0 0
    %1416 = vmatprep.subr.bf16.mxu0 0
    %1417 = vmatpush1.bf16.xpose.msra.mxu0 0
    %1418 = vmatprep.subr.bf16.mxu0 0
    %1419 = vmatpush1.bf16.xpose.msra.mxu0 0
    %1420 = vmatprep.mubr.bf16.mxu0 %v296
    %1421 = vmatmul.mubr.bf16.gmra.mrb[0].mxu0 %v294
    %v1422 = vpop.f32.mrb[0].mxu0
    %v1423 = vadd.f32 %v1383, %v1422
    %v1424 = vpop.f32.mrb[0].mxu0
    %v1425 = vpop.f32.mrb[0].mxu0
    %v1426 = vpop.f32.mrb[0].mxu0
    %1427 = vdwg.mxu0
    %1428 = vmatprep.subr.bf16.mxu0 %v645
    %1429 = vmatpush1.bf16.xpose.msra.mxu0 %v644
    %1430 = vmatprep.subr.bf16.mxu0 %v689
    %1431 = vmatpush1.bf16.xpose.msra.mxu0 %v688
    %1432 = vmatprep.subr.bf16.mxu0 0
    %1433 = vmatpush1.bf16.xpose.msra.mxu0 0
    %1434 = vmatprep.subr.bf16.mxu0 0
    %1435 = vmatpush1.bf16.xpose.msra.mxu0 0
    %1436 = vmatprep.subr.bf16.mxu0 0
    %1437 = vmatpush1.bf16.xpose.msra.mxu0 0
    %1438 = vmatprep.subr.bf16.mxu0 0
    %1439 = vmatpush1.bf16.xpose.msra.mxu0 0
    %1440 = vmatprep.subr.bf16.mxu0 0
    %1441 = vmatpush1.bf16.xpose.msra.mxu0 0
    %1442 = vmatprep.subr.bf16.mxu0 0
    %1443 = vmatpush1.bf16.xpose.msra.mxu0 0
    %1444 = vmatprep.subr.bf16.mxu0 0
    %1445 = vmatpush1.bf16.xpose.msra.mxu0 0
    %1446 = vmatprep.subr.bf16.mxu0 0
    %1447 = vmatpush1.bf16.xpose.msra.mxu0 0
    %1448 = vmatprep.subr.bf16.mxu0 0
    %1449 = vmatpush1.bf16.xpose.msra.mxu0 0
    %1450 = vmatprep.subr.bf16.mxu0 0
    %1451 = vmatpush1.bf16.xpose.msra.mxu0 0
    %1452 = vmatprep.subr.bf16.mxu0 0
    %1453 = vmatpush1.bf16.xpose.msra.mxu0 0
    %1454 = vmatprep.subr.bf16.mxu0 0
    %1455 = vmatpush1.bf16.xpose.msra.mxu0 0
    %1456 = vmatprep.subr.bf16.mxu0 0
    %1457 = vmatpush1.bf16.xpose.msra.mxu0 0
    %1458 = vmatprep.subr.bf16.mxu0 0
    %1459 = vmatpush1.bf16.xpose.msra.mxu0 0
    %1460 = vmatprep.mubr.bf16.mxu0 %v334
    %1461 = vmatmul.mubr.bf16.gmra.mrb[0].mxu0 %v320
    %v1462 = vpop.f32.mrb[0].mxu0
    %v1463 = vadd.f32 %v1423, %v1462
    %v1464 = vpop.f32.mrb[0].mxu0
    %v1465 = vpop.f32.mrb[0].mxu0
    %v1466 = vpop.f32.mrb[0].mxu0
    %1467 = vdwg.mxu0
    %1468 = vmatprep.subr.bf16.mxu0 %v647
    %1469 = vmatpush1.bf16.xpose.msra.mxu0 %v646
    %1470 = vmatprep.subr.bf16.mxu0 %v691
    %1471 = vmatpush1.bf16.xpose.msra.mxu0 %v690
    %1472 = vmatprep.subr.bf16.mxu0 0
    %1473 = vmatpush1.bf16.xpose.msra.mxu0 0
    %1474 = vmatprep.subr.bf16.mxu0 0
    %1475 = vmatpush1.bf16.xpose.msra.mxu0 0
    %1476 = vmatprep.subr.bf16.mxu0 0
    %1477 = vmatpush1.bf16.xpose.msra.mxu0 0
    %1478 = vmatprep.subr.bf16.mxu0 0
    %1479 = vmatpush1.bf16.xpose.msra.mxu0 0
    %1480 = vmatprep.subr.bf16.mxu0 0
    %1481 = vmatpush1.bf16.xpose.msra.mxu0 0
    %1482 = vmatprep.subr.bf16.mxu0 0
    %1483 = vmatpush1.bf16.xpose.msra.mxu0 0
    %1484 = vmatprep.subr.bf16.mxu0 0
    %1485 = vmatpush1.bf16.xpose.msra.mxu0 0
    %1486 = vmatprep.subr.bf16.mxu0 0
    %1487 = vmatpush1.bf16.xpose.msra.mxu0 0
    %1488 = vmatprep.subr.bf16.mxu0 0
    %1489 = vmatpush1.bf16.xpose.msra.mxu0 0
    %1490 = vmatprep.subr.bf16.mxu0 0
    %1491 = vmatpush1.bf16.xpose.msra.mxu0 0
    %1492 = vmatprep.subr.bf16.mxu0 0
    %1493 = vmatpush1.bf16.xpose.msra.mxu0 0
    %1494 = vmatprep.subr.bf16.mxu0 0
    %1495 = vmatpush1.bf16.xpose.msra.mxu0 0
    %1496 = vmatprep.subr.bf16.mxu0 0
    %1497 = vmatpush1.bf16.xpose.msra.mxu0 0
    %1498 = vmatprep.subr.bf16.mxu0 0
    %1499 = vmatpush1.bf16.xpose.msra.mxu0 0
    %1500 = vmatprep.mubr.bf16.mxu0 %v344
    %1501 = vmatmul.mubr.bf16.gmra.mrb[0].mxu0 %v342
    %v1502 = vpop.f32.mrb[0].mxu0
    %v1503 = vadd.f32 %v1463, %v1502
    %v1504 = vpop.f32.mrb[0].mxu0
    %v1505 = vpop.f32.mrb[0].mxu0
    %v1506 = vpop.f32.mrb[0].mxu0
    %1507 = vdwg.mxu0
    %1508 = vmatprep.subr.bf16.mxu0 %v649
    %1509 = vmatpush1.bf16.xpose.msra.mxu0 %v648
    %1510 = vmatprep.subr.bf16.mxu0 %v693
    %1511 = vmatpush1.bf16.xpose.msra.mxu0 %v692
    %1512 = vmatprep.subr.bf16.mxu0 0
    %1513 = vmatpush1.bf16.xpose.msra.mxu0 0
    %1514 = vmatprep.subr.bf16.mxu0 0
    %1515 = vmatpush1.bf16.xpose.msra.mxu0 0
    %1516 = vmatprep.subr.bf16.mxu0 0
    %1517 = vmatpush1.bf16.xpose.msra.mxu0 0
    %1518 = vmatprep.subr.bf16.mxu0 0
    %1519 = vmatpush1.bf16.xpose.msra.mxu0 0
    %1520 = vmatprep.subr.bf16.mxu0 0
    %1521 = vmatpush1.bf16.xpose.msra.mxu0 0
    %1522 = vmatprep.subr.bf16.mxu0 0
    %1523 = vmatpush1.bf16.xpose.msra.mxu0 0
    %1524 = vmatprep.subr.bf16.mxu0 0
    %1525 = vmatpush1.bf16.xpose.msra.mxu0 0
    %1526 = vmatprep.subr.bf16.mxu0 0
    %1527 = vmatpush1.bf16.xpose.msra.mxu0 0
    %1528 = vmatprep.subr.bf16.mxu0 0
    %1529 = vmatpush1.bf16.xpose.msra.mxu0 0
    %1530 = vmatprep.subr.bf16.mxu0 0
    %1531 = vmatpush1.bf16.xpose.msra.mxu0 0
    %1532 = vmatprep.subr.bf16.mxu0 0
    %1533 = vmatpush1.bf16.xpose.msra.mxu0 0
    %1534 = vmatprep.subr.bf16.mxu0 0
    %1535 = vmatpush1.bf16.xpose.msra.mxu0 0
    %1536 = vmatprep.subr.bf16.mxu0 0
    %1537 = vmatpush1.bf16.xpose.msra.mxu0 0
    %1538 = vmatprep.subr.bf16.mxu0 0
    %1539 = vmatpush1.bf16.xpose.msra.mxu0 0
    %1540 = vmatprep.mubr.bf16.mxu0 %v341
    %1541 = vmatmul.mubr.bf16.gmra.mrb[0].mxu0 %v327
    %v1542 = vpop.f32.mrb[0].mxu0
    %v1543 = vadd.f32 %v1503, %v1542
    %v1544 = vpop.f32.mrb[0].mxu0
    %v1545 = vpop.f32.mrb[0].mxu0
    %v1546 = vpop.f32.mrb[0].mxu0
    %1547 = vdwg.mxu0
    %1548 = vmatprep.subr.bf16.mxu0 %v651
    %1549 = vmatpush1.bf16.xpose.msra.mxu0 %v650
    %1550 = vmatprep.subr.bf16.mxu0 %v695
    %1551 = vmatpush1.bf16.xpose.msra.mxu0 %v694
    %1552 = vmatprep.subr.bf16.mxu0 0
    %1553 = vmatpush1.bf16.xpose.msra.mxu0 0
    %1554 = vmatprep.subr.bf16.mxu0 0
    %1555 = vmatpush1.bf16.xpose.msra.mxu0 0
    %1556 = vmatprep.subr.bf16.mxu0 0
    %1557 = vmatpush1.bf16.xpose.msra.mxu0 0
    %1558 = vmatprep.subr.bf16.mxu0 0
    %1559 = vmatpush1.bf16.xpose.msra.mxu0 0
    %1560 = vmatprep.subr.bf16.mxu0 0
    %1561 = vmatpush1.bf16.xpose.msra.mxu0 0
    %1562 = vmatprep.subr.bf16.mxu0 0
    %1563 = vmatpush1.bf16.xpose.msra.mxu0 0
    %1564 = vmatprep.subr.bf16.mxu0 0
    %1565 = vmatpush1.bf16.xpose.msra.mxu0 0
    %1566 = vmatprep.subr.bf16.mxu0 0
    %1567 = vmatpush1.bf16.xpose.msra.mxu0 0
    %1568 = vmatprep.subr.bf16.mxu0 0
    %1569 = vmatpush1.bf16.xpose.msra.mxu0 0
    %1570 = vmatprep.subr.bf16.mxu0 0
    %1571 = vmatpush1.bf16.xpose.msra.mxu0 0
    %1572 = vmatprep.subr.bf16.mxu0 0
    %1573 = vmatpush1.bf16.xpose.msra.mxu0 0
    %1574 = vmatprep.subr.bf16.mxu0 0
    %1575 = vmatpush1.bf16.xpose.msra.mxu0 0
    %1576 = vmatprep.subr.bf16.mxu0 0
    %1577 = vmatpush1.bf16.xpose.msra.mxu0 0
    %1578 = vmatprep.subr.bf16.mxu0 0
    %1579 = vmatpush1.bf16.xpose.msra.mxu0 0
    %1580 = vmatprep.mubr.bf16.mxu0 %v345
    %1581 = vmatmul.mubr.bf16.gmra.mrb[0].mxu0 %v343
    %v1582 = vpop.f32.mrb[0].mxu0
    %v1583 = vadd.f32 %v1543, %v1582
    %v1584 = vpop.f32.mrb[0].mxu0
    %v1585 = vpop.f32.mrb[0].mxu0
    %v1586 = vpop.f32.mrb[0].mxu0
    %1587 = vdwg.mxu0
    %1588 = vmatprep.subr.bf16.mxu0 %v653
    %1589 = vmatpush1.bf16.xpose.msra.mxu0 %v652
    %1590 = vmatprep.subr.bf16.mxu0 %v697
    %1591 = vmatpush1.bf16.xpose.msra.mxu0 %v696
    %1592 = vmatprep.subr.bf16.mxu0 0
    %1593 = vmatpush1.bf16.xpose.msra.mxu0 0
    %1594 = vmatprep.subr.bf16.mxu0 0
    %1595 = vmatpush1.bf16.xpose.msra.mxu0 0
    %1596 = vmatprep.subr.bf16.mxu0 0
    %1597 = vmatpush1.bf16.xpose.msra.mxu0 0
    %1598 = vmatprep.subr.bf16.mxu0 0
    %1599 = vmatpush1.bf16.xpose.msra.mxu0 0
    %1600 = vmatprep.subr.bf16.mxu0 0
    %1601 = vmatpush1.bf16.xpose.msra.mxu0 0
    %1602 = vmatprep.subr.bf16.mxu0 0
    %1603 = vmatpush1.bf16.xpose.msra.mxu0 0
    %1604 = vmatprep.subr.bf16.mxu0 0
    %1605 = vmatpush1.bf16.xpose.msra.mxu0 0
    %1606 = vmatprep.subr.bf16.mxu0 0
    %1607 = vmatpush1.bf16.xpose.msra.mxu0 0
    %1608 = vmatprep.subr.bf16.mxu0 0
    %1609 = vmatpush1.bf16.xpose.msra.mxu0 0
    %1610 = vmatprep.subr.bf16.mxu0 0
    %1611 = vmatpush1.bf16.xpose.msra.mxu0 0
    %1612 = vmatprep.subr.bf16.mxu0 0
    %1613 = vmatpush1.bf16.xpose.msra.mxu0 0
    %1614 = vmatprep.subr.bf16.mxu0 0
    %1615 = vmatpush1.bf16.xpose.msra.mxu0 0
    %1616 = vmatprep.subr.bf16.mxu0 0
    %1617 = vmatpush1.bf16.xpose.msra.mxu0 0
    %1618 = vmatprep.subr.bf16.mxu0 0
    %1619 = vmatpush1.bf16.xpose.msra.mxu0 0
    %1620 = vmatprep.mubr.bf16.mxu0 %v367
    %1621 = vmatmul.mubr.bf16.gmra.mrb[0].mxu0 %v360
    %v1622 = vpop.f32.mrb[0].mxu0
    %v1623 = vadd.f32 %v1583, %v1622
    %v1624 = vpop.f32.mrb[0].mxu0
    %v1625 = vpop.f32.mrb[0].mxu0
    %v1626 = vpop.f32.mrb[0].mxu0
    %1627 = vdwg.mxu0
    %1628 = vmatprep.subr.bf16.mxu0 %v655
    %1629 = vmatpush1.bf16.xpose.msra.mxu0 %v654
    %1630 = vmatprep.subr.bf16.mxu0 %v699
    %1631 = vmatpush1.bf16.xpose.msra.mxu0 %v698
    %1632 = vmatprep.subr.bf16.mxu0 0
    %1633 = vmatpush1.bf16.xpose.msra.mxu0 0
    %1634 = vmatprep.subr.bf16.mxu0 0
    %1635 = vmatpush1.bf16.xpose.msra.mxu0 0
    %1636 = vmatprep.subr.bf16.mxu0 0
    %1637 = vmatpush1.bf16.xpose.msra.mxu0 0
    %1638 = vmatprep.subr.bf16.mxu0 0
    %1639 = vmatpush1.bf16.xpose.msra.mxu0 0
    %1640 = vmatprep.subr.bf16.mxu0 0
    %1641 = vmatpush1.bf16.xpose.msra.mxu0 0
    %1642 = vmatprep.subr.bf16.mxu0 0
    %1643 = vmatpush1.bf16.xpose.msra.mxu0 0
    %1644 = vmatprep.subr.bf16.mxu0 0
    %1645 = vmatpush1.bf16.xpose.msra.mxu0 0
    %1646 = vmatprep.subr.bf16.mxu0 0
    %1647 = vmatpush1.bf16.xpose.msra.mxu0 0
    %1648 = vmatprep.subr.bf16.mxu0 0
    %1649 = vmatpush1.bf16.xpose.msra.mxu0 0
    %1650 = vmatprep.subr.bf16.mxu0 0
    %1651 = vmatpush1.bf16.xpose.msra.mxu0 0
    %1652 = vmatprep.subr.bf16.mxu0 0
    %1653 = vmatpush1.bf16.xpose.msra.mxu0 0
    %1654 = vmatprep.subr.bf16.mxu0 0
    %1655 = vmatpush1.bf16.xpose.msra.mxu0 0
    %1656 = vmatprep.subr.bf16.mxu0 0
    %1657 = vmatpush1.bf16.xpose.msra.mxu0 0
    %1658 = vmatprep.subr.bf16.mxu0 0
    %1659 = vmatpush1.bf16.xpose.msra.mxu0 0
    %1660 = vmatprep.mubr.bf16.mxu0 %v369
    %1661 = vmatmul.mubr.bf16.gmra.mrb[0].mxu0 %v368
    %v1662 = vpop.f32.mrb[0].mxu0
    %v1663 = vadd.f32 %v1623, %v1662
    %v1664 = vpop.f32.mrb[0].mxu0
    %v1665 = vpop.f32.mrb[0].mxu0
    %v1666 = vpop.f32.mrb[0].mxu0
    %1667 = vdwg.mxu0
    %vm1668 = vcmask 173056
    %v1669 = vsel %vm1668, %v1663, -inf
    %1670 = vmax.xlane.f32.xlu0 %v1669
    %v1671 = vpop.xlane.xlu0 %1670
    %v1672 = vsub.f32 %v1663, %v1671
    %v1673 = vmul.f32 %v1672, 1.442695
    %v1674 = vpow.pop %v1673
    %v1675 = vsel %vm1668, %v1674, 0.0
    %1676 = vadd.xlane.f32.xlu0 %v1675
    %v1677 = vpop.xlane.xlu0 %1676
    %v1678 = vrcp.pop %v1677
    %v1679 = vmul.f32 %v1674, %v1678
    %1680 = vst.msk [vmem:[#allocation2] sm:$0x3] %vm1668, %v1679
    // Predicated region
    $region14: #{baseline_forward.7} parent=1 // pred_check
      _
    $region15: #{baseline_forward.7} parent=1 // pred_check_branch
      %1682 = sbr.rel (0) target = $region17
    $region16: #{baseline_forward.7} parent=1 // pred_region
      %s1684 = ssub.s32 32, 32
      %1685 = vsyncadd [#allocation3], %s1684
      %s1687 = sshll.u32 [#allocation2], 4
      %s1688 = int_to_ptr.vmem [resolvable:$true] %s1687
      %1690 = dma.vmem_to_hbm [thread:$0]  %s1688, 32, %s3, [#allocation3]
    $region17: #{baseline_forward.7} parent=1 // pred_fallthru
      _
    // Predicated region
    $region18: #{baseline_forward.7} parent=1 // pred_check
      _
    $region19: #{baseline_forward.7} parent=1 // pred_check_branch
      %1692 = sbr.rel (0) target = $region21
    $region20: #{baseline_forward.7} parent=1 // pred_region
      %1693 = dma.done [#allocation3], 32
    $region21: #{baseline_forward.7} parent=1 // pred_fallthru
      _
    %1694 = vsyncpa [#allocation3], 1

</llo_original>
